<compile_context>
chip_gen: v6e
topology: v6e:2x2x1
jax: 0.10.0
libtpu: 0.0.40
codegen_flags: <defaults>
</compile_context>

<pallas_src>
import math
import jax
import jax.numpy as jnp
from jax import lax
from jax.experimental import pallas as pl
from jax.experimental.pallas import tpu as pltpu


def _make_mha_kernel(n_head, T, TK, D, num_tiles, compute_dtype):
    n_d = D // n_head
    TQ = TK  # query tile size == key tile size

    def kernel(q_ref, k_ref, v_ref,
               wqT_ref, bq_ref, wkT_ref, bk_ref, wvT_ref, bv_ref,
               wcT_ref, bc_ref,
               o_ref, qp_ref, acc_ref, s_ref):
        kb = pl.program_id(1)

        # ---- once per batch element: init accumulator, cache full-width Q proj ----
        @pl.when(kb == 0)
        def _():
            acc_ref[...] = jnp.zeros_like(acc_ref)
            qp = jnp.dot(q_ref[...].astype(compute_dtype), wqT_ref[...],
                         preferred_element_type=jnp.float32) + bq_ref[...]
            qp_ref[...] = qp.astype(qp_ref.dtype)       # scale already folded in

        # ---- full-width K / V projections for this key block: (TK,D)x(D,D) ----
        kp = (jnp.dot(k_ref[...].astype(compute_dtype), wkT_ref[...],
                      preferred_element_type=jnp.float32)
              + bk_ref[...]).astype(compute_dtype)
        vp = (jnp.dot(v_ref[...].astype(compute_dtype), wvT_ref[...],
                      preferred_element_type=jnp.float32)
              + bv_ref[...]).astype(compute_dtype)

        # causal mask for the diagonal (qt == kb) tile; qt > kb tiles are fully valid
        row = lax.broadcasted_iota(jnp.int32, (TQ, TK), 0)
        col = lax.broadcasted_iota(jnp.int32, (TQ, TK), 1)
        diag_valid = col <= row

        for h in range(n_head):                       # static head loop (n_head small)
            lo, hi = h * n_d, (h + 1) * n_d
            kh = kp[:, lo:hi]                         # (TK, n_d)
            vh = vp[:, lo:hi]                         # (TK, n_d)

            # ---- pass 1: scores for active query tiles, online column max / sum ----
            def p1(qt, carry):
                m, l = carry                          # (1, TK) each, f32
                start = pl.multiple_of(qt * TQ, TQ)
                qh = qp_ref[pl.ds(start, TQ), lo:hi]  # (TQ, n_d), compute dtype
                s = lax.dot_general(qh, kh, (((1,), (1,)), ((), ())),
                                    preferred_element_type=jnp.float32)  # (TQ, TK)
                s = jnp.where(jnp.logical_or(qt > kb, diag_valid), s, -jnp.inf)
                s_ref[pl.ds(start, TQ), :] = s
                m_new = jnp.maximum(m, jnp.max(s, axis=0, keepdims=True))
                l_new = l * jnp.exp(m - m_new) + jnp.sum(jnp.exp(s - m_new),
                                                         axis=0, keepdims=True)
                return m_new, l_new

            m0 = jnp.full((1, TK), -jnp.inf, jnp.float32)
            l0 = jnp.zeros((1, TK), jnp.float32)
            m, l = lax.fori_loop(kb, num_tiles, p1, (m0, l0))

            # softmax over the query axis (dim=-2): fold 1/l into the exponent
            # (every column has >= 1 valid row, so l >= 1 and log(l) is finite)
            mb = m + jnp.log(l)                       # (1, TK)

            # ---- pass 2: probabilities + P.V, accumulate pre-combine z slab ----
            def p2(qt, carry):
                start = pl.multiple_of(qt * TQ, TQ)
                s = s_ref[pl.ds(start, TQ), :]
                a = jnp.exp(s - mb).astype(compute_dtype)           # (TQ, TK)
                z = jnp.dot(a, vh, preferred_element_type=jnp.float32)  # (TQ, n_d)
                acc_ref[pl.ds(start, TQ), lo:hi] += z
                return carry

            lax.fori_loop(kb, num_tiles, p2, 0)

        # ---- epilogue: single full-width combine projection ----
        @pl.when(kb == pl.num_programs(1) - 1)
        def _():
            zc = acc_ref[...].astype(compute_dtype)
            out = jnp.dot(zc, wcT_ref[...],
                          preferred_element_type=jnp.float32) + bc_ref[...]
            o_ref[...] = out.astype(o_ref.dtype)

    return kernel


def mha_pallas(q, k, v, params, n_head, key_block=None,
               compute_dtype=jnp.bfloat16):
    B, T, D = q.shape
    assert D % n_head == 0
    n_d = D // n_head
    scale = 1.0 / math.sqrt(n_d)
    wq, bq, wk, bk, wv, bv, wc, bc = params

    # Key/query tile size: multiple of 8 dividing T (full T for small sequences).
    if key_block is None:
        key_block = T if T <= 512 else 512
    TK = key_block
    assert T % TK == 0, "key_block must divide T"
    num_kb = T // TK

    f32 = jnp.float32
    # ---- wrapper-side layout plumbing (free XLA ops, done once) ----
    wqT = (wq.T * scale).astype(compute_dtype)   # (D, D), 1/sqrt(n_d) folded in
    wkT = wk.T.astype(compute_dtype)
    wvT = wv.T.astype(compute_dtype)
    wcT = wc.T.astype(compute_dtype)
    bq2 = (bq * scale).reshape(1, D).astype(f32)
    bk2 = bk.reshape(1, D).astype(f32)
    bv2 = bv.reshape(1, D).astype(f32)
    bc2 = bc.reshape(1, D).astype(f32)

    const2 = lambda b, kb: (0, 0)

    # rough VMEM budget (cap to sane limits; test shapes are tiny)
    cb = jnp.dtype(compute_dtype).itemsize
    est = (2 * T * D * 4            # q (double-buffered, f32 input)
           + 2 * 2 * TK * D * 4     # k, v tiles (double-buffered)
           + 2 * 4 * D * D * cb     # 4 weight sets (double-buffered)
           + 2 * 4 * D * 4          # biases
           + 2 * T * D * 4          # output (double-buffered)
           + T * D * cb             # qp scratch
           + T * D * 4              # acc scratch
           + T * TK * 4)            # score scratch
    vmem_limit = min(max(int(est * 1.25), 32 * 1024 * 1024), 128 * 1024 * 1024)

    kernel = _make_mha_kernel(n_head, T, TK, D, num_kb, compute_dtype)

    return pl.pallas_call(
        kernel,
        out_shape=jax.ShapeDtypeStruct((B, T, D), q.dtype),
        grid=(B, num_kb),
        in_specs=[
            pl.BlockSpec((None, T, D), lambda b, kb: (b, 0, 0)),    # q (full time)
            pl.BlockSpec((None, TK, D), lambda b, kb: (b, kb, 0)),  # k (key tile)
            pl.BlockSpec((None, TK, D), lambda b, kb: (b, kb, 0)),  # v (key tile)
            pl.BlockSpec((D, D), const2),   # wq.T (scale folded, lane-dense)
            pl.BlockSpec((1, D), const2),   # bq   (scale folded)
            pl.BlockSpec((D, D), const2),   # wk.T
            pl.BlockSpec((1, D), const2),   # bk
            pl.BlockSpec((D, D), const2),   # wv.T
            pl.BlockSpec((1, D), const2),   # bv
            pl.BlockSpec((D, D), const2),   # wc.T
            pl.BlockSpec((1, D), const2),   # bc
        ],
        out_specs=pl.BlockSpec((None, T, D), lambda b, kb: (b, 0, 0)),
        scratch_shapes=[
            pltpu.VMEM((T, D), compute_dtype),   # cached Q projection
            pltpu.VMEM((T, D), jnp.float32),     # pre-combine z accumulator
            pltpu.VMEM((T, TK), jnp.float32),    # per-head score buffer
        ],
        compiler_params=pltpu.CompilerParams(
            dimension_semantics=("parallel", "arbitrary"),
            vmem_limit_bytes=vmem_limit),
    )(q, k, v, wqT, bq2, wkT, bk2, wvT, bv2, wcT, bc2)


def mha_reference(q, k, v, params, n_head):
    """Pure-JAX reference reproducing the PyTorch forward exactly."""
    B, T, D = q.shape
    n_d = D // n_head
    wq, bq, wk, bk, wv, bv, wc, bc = params

    def lin(x, w, b):
        return x @ w.T + b

    qp = lin(q, wq, bq).reshape(B, T, n_head, n_d).transpose(0, 2, 1, 3)
    kp = lin(k, wk, bk).reshape(B, T, n_head, n_d).transpose(0, 2, 1, 3)
    vp = lin(v, wv, bv).reshape(B, T, n_head, n_d).transpose(0, 2, 1, 3)

    s = jnp.einsum("bhtd,bhsd->bhts", qp, kp) / math.sqrt(n_d)
    mask = jnp.tril(jnp.ones((T, T), dtype=bool))
    s = jnp.where(mask, s, -jnp.inf)

    # softmax over dim=-2 (query axis)
    m = jnp.max(s, axis=-2, keepdims=True)
    e = jnp.exp(s - m)
    a = e / jnp.sum(e, axis=-2, keepdims=True)

    z = jnp.einsum("bhts,bhsd->bhtd", a, vp)
    z = z.transpose(0, 2, 1, 3).reshape(B, T, D)
    return lin(z, wc, bc)


if __name__ == "__main__":
    batch, time, d_model, n_head = 2, 8, 32, 4

    key = jax.random.PRNGKey(0)
    keys = jax.random.split(key, 11)

    q = jax.random.normal(keys[0], (batch, time, d_model), dtype=jnp.float32)
    k = jax.random.normal(keys[1], (batch, time, d_model), dtype=jnp.float32)
    v = jax.random.normal(keys[2], (batch, time, d_model), dtype=jnp.float32)

    def init_linear(kw, kb, fan_in, fan_out):
        bound = 1.0 / math.sqrt(fan_in)
        w = jax.random.uniform(kw, (fan_out, fan_in), jnp.float32, -bound, bound)
        b = jax.random.uniform(kb, (fan_out,), jnp.float32, -bound, bound)
        return w, b

    wq, bq = init_linear(keys[3], keys[4], d_model, d_model)
    wk, bk = init_linear(keys[5], keys[6], d_model, d_model)
    wv, bv = init_linear(keys[7], keys[8], d_model, d_model)
    wc, bc = init_linear(keys[9], keys[10], d_model, d_model)
    params = (wq, bq, wk, bk, wv, bv, wc, bc)

    ref = mha_reference(q, k, v, params, n_head)

    # f32 MXU path: must match the f32 reference tightly.
    out_f32 = mha_pallas(q, k, v, params, n_head, compute_dtype=jnp.float32)
    out_f32 = jax.block_until_ready(out_f32)
    assert out_f32.shape == (batch, time, d_model)
    assert jnp.allclose(out_f32, ref, atol=1e-4, rtol=1e-4), "f32 mismatch vs reference"

    # bf16 MXU path (production / perf-review path): f32 accumulation, looser tol.
    out_bf16 = mha_pallas(q, k, v, params, n_head, compute_dtype=jnp.bfloat16)
    out_bf16 = jax.block_until_ready(out_bf16)
    assert jnp.allclose(out_bf16, ref, atol=5e-2, rtol=5e-2), "bf16 mismatch vs reference"

    print("KERNEL_OK")
</pallas_src>

<mosaic_0001>
module attributes {stable_mosaic.version = 11 : i64} {
  func.func @kernel(%arg0: i32, %arg1: i32, %arg2: memref<1x8x32xf32, #tpu.memory_space<vmem>>, %arg3: memref<1x8x32xf32, #tpu.memory_space<vmem>>, %arg4: memref<1x8x32xf32, #tpu.memory_space<vmem>>, %arg5: memref<32x32xf32, #tpu.memory_space<vmem>>, %arg6: memref<1x32xf32, #tpu.memory_space<vmem>>, %arg7: memref<32x32xf32, #tpu.memory_space<vmem>>, %arg8: memref<1x32xf32, #tpu.memory_space<vmem>>, %arg9: memref<32x32xf32, #tpu.memory_space<vmem>>, %arg10: memref<1x32xf32, #tpu.memory_space<vmem>>, %arg11: memref<32x32xf32, #tpu.memory_space<vmem>>, %arg12: memref<1x32xf32, #tpu.memory_space<vmem>>, %arg13: memref<1x8x32xf32, #tpu.memory_space<vmem>>, %arg14: memref<8x32xf32, #tpu.memory_space<vmem>>, %arg15: memref<8x32xf32, #tpu.memory_space<vmem>>, %arg16: memref<8x8xf32, #tpu.memory_space<vmem>>) attributes {dimension_semantics = [#tpu.dimension_semantics<parallel>, #tpu.dimension_semantics<arbitrary>], iteration_bounds = array<i64: 2, 1>, scalar_prefetch = 0 : i64, scratch_operands = 3 : i64, tpu.core_type = #tpu.core_type<tc>, window_params = [{transform_indices = @transform_0, window_bounds = array<i64: 1, 8, 32>}, {transform_indices = @transform_1, window_bounds = array<i64: 1, 8, 32>}, {transform_indices = @transform_2, window_bounds = array<i64: 1, 8, 32>}, {pipeline_mode = #tpu.pipeline_mode<synchronous>, transform_indices = @transform_3, window_bounds = array<i64: 32, 32>}, {pipeline_mode = #tpu.pipeline_mode<synchronous>, transform_indices = @transform_4, window_bounds = array<i64: 1, 32>}, {pipeline_mode = #tpu.pipeline_mode<synchronous>, transform_indices = @transform_5, window_bounds = array<i64: 32, 32>}, {pipeline_mode = #tpu.pipeline_mode<synchronous>, transform_indices = @transform_6, window_bounds = array<i64: 1, 32>}, {pipeline_mode = #tpu.pipeline_mode<synchronous>, transform_indices = @transform_7, window_bounds = array<i64: 32, 32>}, {pipeline_mode = #tpu.pipeline_mode<synchronous>, transform_indices = @transform_8, window_bounds = array<i64: 1, 32>}, {pipeline_mode = #tpu.pipeline_mode<synchronous>, transform_indices = @transform_9, window_bounds = array<i64: 32, 32>}, {pipeline_mode = #tpu.pipeline_mode<synchronous>, transform_indices = @transform_10, window_bounds = array<i64: 1, 32>}, {transform_indices = @transform_11, window_bounds = array<i64: 1, 8, 32>}]} {
    %c0_i32 = arith.constant 0 : i32
    %0 = arith.cmpi eq, %arg1, %c0_i32 : i32
    %1 = arith.extui %0 : i1 to i32
    %c0_i32_0 = arith.constant 0 : i32
    %2 = arith.cmpi ne, %1, %c0_i32_0 : i32
    scf.if %2 {
      %cst_44 = arith.constant 0.000000e+00 : f32
      %67 = vector.broadcast %cst_44 : f32 to vector<8x32xf32>
      %c0_45 = arith.constant 0 : index
      %c0_46 = arith.constant 0 : index
      %68 = vector.load %arg15[%c0_45, %c0_46] : memref<8x32xf32, #tpu.memory_space<vmem>>, vector<8x32xf32>
      tpu.vector_store %arg15[%c0_45, %c0_46], %67 {strides = array<i32>} : memref<8x32xf32, #tpu.memory_space<vmem>>, vector<8x32xf32>,
      %c0_47 = arith.constant 0 : index
      %c0_48 = arith.constant 0 : index
      %c0_49 = arith.constant 0 : index
      %69 = vector.load %arg2[%c0_47, %c0_48, %c0_49] : memref<1x8x32xf32, #tpu.memory_space<vmem>>, vector<1x8x32xf32>
      %70 = vector.shape_cast %69 : vector<1x8x32xf32> to vector<8x32xf32>
      %c0_50 = arith.constant 0 : index
      %c0_51 = arith.constant 0 : index
      %71 = vector.load %arg5[%c0_50, %c0_51] : memref<32x32xf32, #tpu.memory_space<vmem>>, vector<32x32xf32>
      %cst_52 = arith.constant dense<0.000000e+00> : vector<8x32xf32>
      %72 = tpu.matmul %70, %71, %cst_52 {dimension_numbers = #tpu.dot_dimension_numbers<[1], [0], [0], [1], [0, 0, 1, 1], [], []>} : vector<8x32xf32>, vector<32x32xf32>, vector<8x32xf32> -> vector<8x32xf32>
      %c0_53 = arith.constant 0 : index
      %c0_54 = arith.constant 0 : index
      %73 = vector.load %arg6[%c0_53, %c0_54] : memref<1x32xf32, #tpu.memory_space<vmem>>, vector<1x32xf32>
      %74 = vector.broadcast %73 : vector<1x32xf32> to vector<8x32xf32>
      %75 = arith.addf %72, %74 : vector<8x32xf32>
      %c0_55 = arith.constant 0 : index
      %c0_56 = arith.constant 0 : index
      %76 = vector.load %arg14[%c0_55, %c0_56] : memref<8x32xf32, #tpu.memory_space<vmem>>, vector<8x32xf32>
      tpu.vector_store %arg14[%c0_55, %c0_56], %75 {strides = array<i32>} : memref<8x32xf32, #tpu.memory_space<vmem>>, vector<8x32xf32>,
    } else {
    }
    %c0 = arith.constant 0 : index
    %c0_1 = arith.constant 0 : index
    %c0_2 = arith.constant 0 : index
    %3 = vector.load %arg3[%c0, %c0_1, %c0_2] : memref<1x8x32xf32, #tpu.memory_space<vmem>>, vector<1x8x32xf32>
    %4 = vector.shape_cast %3 : vector<1x8x32xf32> to vector<8x32xf32>
    %c0_3 = arith.constant 0 : index
    %c0_4 = arith.constant 0 : index
    %5 = vector.load %arg7[%c0_3, %c0_4] : memref<32x32xf32, #tpu.memory_space<vmem>>, vector<32x32xf32>
    %cst = arith.constant dense<0.000000e+00> : vector<8x32xf32>
    %6 = tpu.matmul %4, %5, %cst {dimension_numbers = #tpu.dot_dimension_numbers<[1], [0], [0], [1], [0, 0, 1, 1], [], []>} : vector<8x32xf32>, vector<32x32xf32>, vector<8x32xf32> -> vector<8x32xf32>
    %c0_5 = arith.constant 0 : index
    %c0_6 = arith.constant 0 : index
    %7 = vector.load %arg8[%c0_5, %c0_6] : memref<1x32xf32, #tpu.memory_space<vmem>>, vector<1x32xf32>
    %8 = vector.broadcast %7 : vector<1x32xf32> to vector<8x32xf32>
    %9 = arith.addf %6, %8 : vector<8x32xf32>
    %c0_7 = arith.constant 0 : index
    %c0_8 = arith.constant 0 : index
    %c0_9 = arith.constant 0 : index
    %10 = vector.load %arg4[%c0_7, %c0_8, %c0_9] : memref<1x8x32xf32, #tpu.memory_space<vmem>>, vector<1x8x32xf32>
    %11 = vector.shape_cast %10 : vector<1x8x32xf32> to vector<8x32xf32>
    %c0_10 = arith.constant 0 : index
    %c0_11 = arith.constant 0 : index
    %12 = vector.load %arg9[%c0_10, %c0_11] : memref<32x32xf32, #tpu.memory_space<vmem>>, vector<32x32xf32>
    %cst_12 = arith.constant dense<0.000000e+00> : vector<8x32xf32>
    %13 = tpu.matmul %11, %12, %cst_12 {dimension_numbers = #tpu.dot_dimension_numbers<[1], [0], [0], [1], [0, 0, 1, 1], [], []>} : vector<8x32xf32>, vector<32x32xf32>, vector<8x32xf32> -> vector<8x32xf32>
    %c0_13 = arith.constant 0 : index
    %c0_14 = arith.constant 0 : index
    %14 = vector.load %arg10[%c0_13, %c0_14] : memref<1x32xf32, #tpu.memory_space<vmem>>, vector<1x32xf32>
    %15 = vector.broadcast %14 : vector<1x32xf32> to vector<8x32xf32>
    %16 = arith.addf %13, %15 : vector<8x32xf32>
    %17 = tpu.iota {dimensions = array<i32: 0>} : vector<8x8xi32>
    %18 = tpu.iota {dimensions = array<i32: 1>} : vector<8x8xi32>
    %19 = arith.cmpi sle, %18, %17 : vector<8x8xi32>
    %20 = vector.extract_strided_slice %9 {offsets = [0, 0], sizes = [8, 8], strides = [1, 1]} : vector<8x32xf32> to vector<8x8xf32>
    %21 = vector.extract_strided_slice %16 {offsets = [0, 0], sizes = [8, 8], strides = [1, 1]} : vector<8x32xf32> to vector<8x8xf32>
    %cst_15 = arith.constant 0xFF800000 : f32
    %22 = vector.broadcast %cst_15 : f32 to vector<1x8xf32>
    %cst_16 = arith.constant 0.000000e+00 : f32
    %23 = vector.broadcast %cst_16 : f32 to vector<1x8xf32>
    %c1_i32 = arith.constant 1 : i32
    %24 = arith.subi %c1_i32, %arg1 : i32
    %25 = arith.addi %arg1, %24 : i32
    %c1_i32_17 = arith.constant 1 : i32
    %26:2 = scf.for %arg17 = %arg1 to %25 step %c1_i32_17 iter_args(%arg18 = %22, %arg19 = %23) -> (vector<1x8xf32>, vector<1x8xf32>)  : i32 {
      %c8_i32 = arith.constant 8 : i32
      %67 = arith.muli %arg17, %c8_i32 : i32
      %68 = tpu.assume_multiple %67, 8 : i32
      %69 = arith.index_cast %68 : i32 to index
      %c0_44 = arith.constant 0 : index
      %70 = vector.load %arg14[%69, %c0_44] : memref<8x32xf32, #tpu.memory_space<vmem>>, vector<8x8xf32>
      %cst_45 = arith.constant dense<0.000000e+00> : vector<8x8xf32>
      %71 = tpu.matmul %70, %20, %cst_45 {dimension_numbers = #tpu.dot_dimension_numbers<[1], [1], [0], [0], [0, 0, 1, 0], [], []>} : vector<8x8xf32>, vector<8x8xf32>, vector<8x8xf32> -> vector<8x8xf32>
      %72 = arith.cmpi sgt, %arg17, %arg1 : i32
      %73 = vector.broadcast %72 : i1 to vector<8x8xi1>
      %74 = arith.ori %73, %19 : vector<8x8xi1>
      %cst_46 = arith.constant 0xFF800000 : f32
      %75 = vector.broadcast %cst_46 : f32 to vector<8x8xf32>
      %76 = arith.select %74, %71, %75 : vector<8x8xi1>, vector<8x8xf32>
      %77 = arith.index_cast %68 : i32 to index
      %c0_47 = arith.constant 0 : index
      %78 = vector.load %arg16[%77, %c0_47] : memref<8x8xf32, #tpu.memory_space<vmem>>, vector<8x8xf32>
      tpu.vector_store %arg16[%77, %c0_47], %76 {strides = array<i32>} : memref<8x8xf32, #tpu.memory_space<vmem>>, vector<8x8xf32>,
      %cst_48 = arith.constant dense<0xFF800000> : vector<8xf32>
      %79 = vector.multi_reduction <maximumf>, %76, %cst_48 [0] : vector<8x8xf32> to vector<8xf32>
      %80 = vector.shape_cast %79 : vector<8xf32> to vector<1x8xf32>
      %81 = arith.maximumf %arg18, %80 : vector<1x8xf32>
      %82 = arith.subf %arg18, %81 : vector<1x8xf32>
      %83 = math.exp %82 : vector<1x8xf32>
      %84 = arith.mulf %arg19, %83 : vector<1x8xf32>
      %85 = vector.broadcast %81 : vector<1x8xf32> to vector<8x8xf32>
      %86 = arith.subf %76, %85 : vector<8x8xf32>
      %87 = math.exp %86 : vector<8x8xf32>
      %cst_49 = arith.constant dense<0.000000e+00> : vector<8xf32>
      %88 = vector.multi_reduction <add>, %87, %cst_49 [0] : vector<8x8xf32> to vector<8xf32>
      %89 = vector.shape_cast %88 : vector<8xf32> to vector<1x8xf32>
      %90 = arith.addf %84, %89 : vector<1x8xf32>
      scf.yield %81, %90 : vector<1x8xf32>, vector<1x8xf32>
    }
    %27 = math.log %26#1 : vector<1x8xf32>
    %28 = arith.addf %26#0, %27 : vector<1x8xf32>
    %c0_i32_18 = arith.constant 0 : i32
    %c1_i32_19 = arith.constant 1 : i32
    %29 = arith.subi %c1_i32_19, %arg1 : i32
    %30 = arith.addi %arg1, %29 : i32
    %c1_i32_20 = arith.constant 1 : i32
    scf.for %arg17 = %arg1 to %30 step %c1_i32_20  : i32 {
      %c8_i32 = arith.constant 8 : i32
      %67 = arith.muli %arg17, %c8_i32 : i32
      %68 = tpu.assume_multiple %67, 8 : i32
      %69 = arith.index_cast %68 : i32 to index
      %c0_44 = arith.constant 0 : index
      %70 = vector.load %arg16[%69, %c0_44] : memref<8x8xf32, #tpu.memory_space<vmem>>, vector<8x8xf32>
      %71 = vector.broadcast %28 : vector<1x8xf32> to vector<8x8xf32>
      %72 = arith.subf %70, %71 : vector<8x8xf32>
      %73 = math.exp %72 : vector<8x8xf32>
      %cst_45 = arith.constant dense<0.000000e+00> : vector<8x8xf32>
      %74 = tpu.matmul %73, %21, %cst_45 {dimension_numbers = #tpu.dot_dimension_numbers<[1], [0], [0], [1], [0, 0, 1, 1], [], []>} : vector<8x8xf32>, vector<8x8xf32>, vector<8x8xf32> -> vector<8x8xf32>
      %75 = arith.index_cast %68 : i32 to index
      %c0_46 = arith.constant 0 : index
      %76 = vector.load %arg15[%75, %c0_46] : memref<8x32xf32, #tpu.memory_space<vmem>>, vector<8x8xf32>
      %77 = arith.addf %76, %74 : vector<8x8xf32>
      %78 = arith.index_cast %68 : i32 to index
      %c0_47 = arith.constant 0 : index
      %79 = vector.load %arg15[%78, %c0_47] : memref<8x32xf32, #tpu.memory_space<vmem>>, vector<8x8xf32>
      tpu.vector_store %arg15[%78, %c0_47], %77 {strides = array<i32>} : memref<8x32xf32, #tpu.memory_space<vmem>>, vector<8x8xf32>,
    }
    %31 = vector.extract_strided_slice %9 {offsets = [0, 8], sizes = [8, 8], strides = [1, 1]} : vector<8x32xf32> to vector<8x8xf32>
    %32 = vector.extract_strided_slice %16 {offsets = [0, 8], sizes = [8, 8], strides = [1, 1]} : vector<8x32xf32> to vector<8x8xf32>
    %cst_21 = arith.constant 0xFF800000 : f32
    %33 = vector.broadcast %cst_21 : f32 to vector<1x8xf32>
    %cst_22 = arith.constant 0.000000e+00 : f32
    %34 = vector.broadcast %cst_22 : f32 to vector<1x8xf32>
    %c1_i32_23 = arith.constant 1 : i32
    %35 = arith.subi %c1_i32_23, %arg1 : i32
    %36 = arith.addi %arg1, %35 : i32
    %c1_i32_24 = arith.constant 1 : i32
    %37:2 = scf.for %arg17 = %arg1 to %36 step %c1_i32_24 iter_args(%arg18 = %33, %arg19 = %34) -> (vector<1x8xf32>, vector<1x8xf32>)  : i32 {
      %c8_i32 = arith.constant 8 : i32
      %67 = arith.muli %arg17, %c8_i32 : i32
      %68 = tpu.assume_multiple %67, 8 : i32
      %69 = arith.index_cast %68 : i32 to index
      %c8 = arith.constant 8 : index
      %70 = vector.load %arg14[%69, %c8] : memref<8x32xf32, #tpu.memory_space<vmem>>, vector<8x8xf32>
      %cst_44 = arith.constant dense<0.000000e+00> : vector<8x8xf32>
      %71 = tpu.matmul %70, %31, %cst_44 {dimension_numbers = #tpu.dot_dimension_numbers<[1], [1], [0], [0], [0, 0, 1, 0], [], []>} : vector<8x8xf32>, vector<8x8xf32>, vector<8x8xf32> -> vector<8x8xf32>
      %72 = arith.cmpi sgt, %arg17, %arg1 : i32
      %73 = vector.broadcast %72 : i1 to vector<8x8xi1>
      %74 = arith.ori %73, %19 : vector<8x8xi1>
      %cst_45 = arith.constant 0xFF800000 : f32
      %75 = vector.broadcast %cst_45 : f32 to vector<8x8xf32>
      %76 = arith.select %74, %71, %75 : vector<8x8xi1>, vector<8x8xf32>
      %77 = arith.index_cast %68 : i32 to index
      %c0_46 = arith.constant 0 : index
      %78 = vector.load %arg16[%77, %c0_46] : memref<8x8xf32, #tpu.memory_space<vmem>>, vector<8x8xf32>
      tpu.vector_store %arg16[%77, %c0_46], %76 {strides = array<i32>} : memref<8x8xf32, #tpu.memory_space<vmem>>, vector<8x8xf32>,
      %cst_47 = arith.constant dense<0xFF800000> : vector<8xf32>
      %79 = vector.multi_reduction <maximumf>, %76, %cst_47 [0] : vector<8x8xf32> to vector<8xf32>
      %80 = vector.shape_cast %79 : vector<8xf32> to vector<1x8xf32>
      %81 = arith.maximumf %arg18, %80 : vector<1x8xf32>
      %82 = arith.subf %arg18, %81 : vector<1x8xf32>
      %83 = math.exp %82 : vector<1x8xf32>
      %84 = arith.mulf %arg19, %83 : vector<1x8xf32>
      %85 = vector.broadcast %81 : vector<1x8xf32> to vector<8x8xf32>
      %86 = arith.subf %76, %85 : vector<8x8xf32>
      %87 = math.exp %86 : vector<8x8xf32>
      %cst_48 = arith.constant dense<0.000000e+00> : vector<8xf32>
      %88 = vector.multi_reduction <add>, %87, %cst_48 [0] : vector<8x8xf32> to vector<8xf32>
      %89 = vector.shape_cast %88 : vector<8xf32> to vector<1x8xf32>
      %90 = arith.addf %84, %89 : vector<1x8xf32>
      scf.yield %81, %90 : vector<1x8xf32>, vector<1x8xf32>
    }
    %38 = math.log %37#1 : vector<1x8xf32>
    %39 = arith.addf %37#0, %38 : vector<1x8xf32>
    %c0_i32_25 = arith.constant 0 : i32
    %c1_i32_26 = arith.constant 1 : i32
    %40 = arith.subi %c1_i32_26, %arg1 : i32
    %41 = arith.addi %arg1, %40 : i32
    %c1_i32_27 = arith.constant 1 : i32
    scf.for %arg17 = %arg1 to %41 step %c1_i32_27  : i32 {
      %c8_i32 = arith.constant 8 : i32
      %67 = arith.muli %arg17, %c8_i32 : i32
      %68 = tpu.assume_multiple %67, 8 : i32
      %69 = arith.index_cast %68 : i32 to index
      %c0_44 = arith.constant 0 : index
      %70 = vector.load %arg16[%69, %c0_44] : memref<8x8xf32, #tpu.memory_space<vmem>>, vector<8x8xf32>
      %71 = vector.broadcast %39 : vector<1x8xf32> to vector<8x8xf32>
      %72 = arith.subf %70, %71 : vector<8x8xf32>
      %73 = math.exp %72 : vector<8x8xf32>
      %cst_45 = arith.constant dense<0.000000e+00> : vector<8x8xf32>
      %74 = tpu.matmul %73, %32, %cst_45 {dimension_numbers = #tpu.dot_dimension_numbers<[1], [0], [0], [1], [0, 0, 1, 1], [], []>} : vector<8x8xf32>, vector<8x8xf32>, vector<8x8xf32> -> vector<8x8xf32>
      %75 = arith.index_cast %68 : i32 to index
      %c8 = arith.constant 8 : index
      %76 = vector.load %arg15[%75, %c8] : memref<8x32xf32, #tpu.memory_space<vmem>>, vector<8x8xf32>
      %77 = arith.addf %76, %74 : vector<8x8xf32>
      %78 = arith.index_cast %68 : i32 to index
      %c8_46 = arith.constant 8 : index
      %79 = vector.load %arg15[%78, %c8_46] : memref<8x32xf32, #tpu.memory_space<vmem>>, vector<8x8xf32>
      tpu.vector_store %arg15[%78, %c8_46], %77 {strides = array<i32>} : memref<8x32xf32, #tpu.memory_space<vmem>>, vector<8x8xf32>,
    }
    %42 = vector.extract_strided_slice %9 {offsets = [0, 16], sizes = [8, 8], strides = [1, 1]} : vector<8x32xf32> to vector<8x8xf32>
    %43 = vector.extract_strided_slice %16 {offsets = [0, 16], sizes = [8, 8], strides = [1, 1]} : vector<8x32xf32> to vector<8x8xf32>
    %cst_28 = arith.constant 0xFF800000 : f32
    %44 = vector.broadcast %cst_28 : f32 to vector<1x8xf32>
    %cst_29 = arith.constant 0.000000e+00 : f32
    %45 = vector.broadcast %cst_29 : f32 to vector<1x8xf32>
    %c1_i32_30 = arith.constant 1 : i32
    %46 = arith.subi %c1_i32_30, %arg1 : i32
    %47 = arith.addi %arg1, %46 : i32
    %c1_i32_31 = arith.constant 1 : i32
    %48:2 = scf.for %arg17 = %arg1 to %47 step %c1_i32_31 iter_args(%arg18 = %44, %arg19 = %45) -> (vector<1x8xf32>, vector<1x8xf32>)  : i32 {
      %c8_i32 = arith.constant 8 : i32
      %67 = arith.muli %arg17, %c8_i32 : i32
      %68 = tpu.assume_multiple %67, 8 : i32
      %69 = arith.index_cast %68 : i32 to index
      %c16 = arith.constant 16 : index
      %70 = vector.load %arg14[%69, %c16] : memref<8x32xf32, #tpu.memory_space<vmem>>, vector<8x8xf32>
      %cst_44 = arith.constant dense<0.000000e+00> : vector<8x8xf32>
      %71 = tpu.matmul %70, %42, %cst_44 {dimension_numbers = #tpu.dot_dimension_numbers<[1], [1], [0], [0], [0, 0, 1, 0], [], []>} : vector<8x8xf32>, vector<8x8xf32>, vector<8x8xf32> -> vector<8x8xf32>
      %72 = arith.cmpi sgt, %arg17, %arg1 : i32
      %73 = vector.broadcast %72 : i1 to vector<8x8xi1>
      %74 = arith.ori %73, %19 : vector<8x8xi1>
      %cst_45 = arith.constant 0xFF800000 : f32
      %75 = vector.broadcast %cst_45 : f32 to vector<8x8xf32>
      %76 = arith.select %74, %71, %75 : vector<8x8xi1>, vector<8x8xf32>
      %77 = arith.index_cast %68 : i32 to index
      %c0_46 = arith.constant 0 : index
      %78 = vector.load %arg16[%77, %c0_46] : memref<8x8xf32, #tpu.memory_space<vmem>>, vector<8x8xf32>
      tpu.vector_store %arg16[%77, %c0_46], %76 {strides = array<i32>} : memref<8x8xf32, #tpu.memory_space<vmem>>, vector<8x8xf32>,
      %cst_47 = arith.constant dense<0xFF800000> : vector<8xf32>
      %79 = vector.multi_reduction <maximumf>, %76, %cst_47 [0] : vector<8x8xf32> to vector<8xf32>
      %80 = vector.shape_cast %79 : vector<8xf32> to vector<1x8xf32>
      %81 = arith.maximumf %arg18, %80 : vector<1x8xf32>
      %82 = arith.subf %arg18, %81 : vector<1x8xf32>
      %83 = math.exp %82 : vector<1x8xf32>
      %84 = arith.mulf %arg19, %83 : vector<1x8xf32>
      %85 = vector.broadcast %81 : vector<1x8xf32> to vector<8x8xf32>
      %86 = arith.subf %76, %85 : vector<8x8xf32>
      %87 = math.exp %86 : vector<8x8xf32>
      %cst_48 = arith.constant dense<0.000000e+00> : vector<8xf32>
      %88 = vector.multi_reduction <add>, %87, %cst_48 [0] : vector<8x8xf32> to vector<8xf32>
      %89 = vector.shape_cast %88 : vector<8xf32> to vector<1x8xf32>
      %90 = arith.addf %84, %89 : vector<1x8xf32>
      scf.yield %81, %90 : vector<1x8xf32>, vector<1x8xf32>
    }
    %49 = math.log %48#1 : vector<1x8xf32>
    %50 = arith.addf %48#0, %49 : vector<1x8xf32>
    %c0_i32_32 = arith.constant 0 : i32
    %c1_i32_33 = arith.constant 1 : i32
    %51 = arith.subi %c1_i32_33, %arg1 : i32
    %52 = arith.addi %arg1, %51 : i32
    %c1_i32_34 = arith.constant 1 : i32
    scf.for %arg17 = %arg1 to %52 step %c1_i32_34  : i32 {
      %c8_i32 = arith.constant 8 : i32
      %67 = arith.muli %arg17, %c8_i32 : i32
      %68 = tpu.assume_multiple %67, 8 : i32
      %69 = arith.index_cast %68 : i32 to index
      %c0_44 = arith.constant 0 : index
      %70 = vector.load %arg16[%69, %c0_44] : memref<8x8xf32, #tpu.memory_space<vmem>>, vector<8x8xf32>
      %71 = vector.broadcast %50 : vector<1x8xf32> to vector<8x8xf32>
      %72 = arith.subf %70, %71 : vector<8x8xf32>
      %73 = math.exp %72 : vector<8x8xf32>
      %cst_45 = arith.constant dense<0.000000e+00> : vector<8x8xf32>
      %74 = tpu.matmul %73, %43, %cst_45 {dimension_numbers = #tpu.dot_dimension_numbers<[1], [0], [0], [1], [0, 0, 1, 1], [], []>} : vector<8x8xf32>, vector<8x8xf32>, vector<8x8xf32> -> vector<8x8xf32>
      %75 = arith.index_cast %68 : i32 to index
      %c16 = arith.constant 16 : index
      %76 = vector.load %arg15[%75, %c16] : memref<8x32xf32, #tpu.memory_space<vmem>>, vector<8x8xf32>
      %77 = arith.addf %76, %74 : vector<8x8xf32>
      %78 = arith.index_cast %68 : i32 to index
      %c16_46 = arith.constant 16 : index
      %79 = vector.load %arg15[%78, %c16_46] : memref<8x32xf32, #tpu.memory_space<vmem>>, vector<8x8xf32>
      tpu.vector_store %arg15[%78, %c16_46], %77 {strides = array<i32>} : memref<8x32xf32, #tpu.memory_space<vmem>>, vector<8x8xf32>,
    }
    %53 = vector.extract_strided_slice %9 {offsets = [0, 24], sizes = [8, 8], strides = [1, 1]} : vector<8x32xf32> to vector<8x8xf32>
    %54 = vector.extract_strided_slice %16 {offsets = [0, 24], sizes = [8, 8], strides = [1, 1]} : vector<8x32xf32> to vector<8x8xf32>
    %cst_35 = arith.constant 0xFF800000 : f32
    %55 = vector.broadcast %cst_35 : f32 to vector<1x8xf32>
    %cst_36 = arith.constant 0.000000e+00 : f32
    %56 = vector.broadcast %cst_36 : f32 to vector<1x8xf32>
    %c1_i32_37 = arith.constant 1 : i32
    %57 = arith.subi %c1_i32_37, %arg1 : i32
    %58 = arith.addi %arg1, %57 : i32
    %c1_i32_38 = arith.constant 1 : i32
    %59:2 = scf.for %arg17 = %arg1 to %58 step %c1_i32_38 iter_args(%arg18 = %55, %arg19 = %56) -> (vector<1x8xf32>, vector<1x8xf32>)  : i32 {
      %c8_i32 = arith.constant 8 : i32
      %67 = arith.muli %arg17, %c8_i32 : i32
      %68 = tpu.assume_multiple %67, 8 : i32
      %69 = arith.index_cast %68 : i32 to index
      %c24 = arith.constant 24 : index
      %70 = vector.load %arg14[%69, %c24] : memref<8x32xf32, #tpu.memory_space<vmem>>, vector<8x8xf32>
      %cst_44 = arith.constant dense<0.000000e+00> : vector<8x8xf32>
      %71 = tpu.matmul %70, %53, %cst_44 {dimension_numbers = #tpu.dot_dimension_numbers<[1], [1], [0], [0], [0, 0, 1, 0], [], []>} : vector<8x8xf32>, vector<8x8xf32>, vector<8x8xf32> -> vector<8x8xf32>
      %72 = arith.cmpi sgt, %arg17, %arg1 : i32
      %73 = vector.broadcast %72 : i1 to vector<8x8xi1>
      %74 = arith.ori %73, %19 : vector<8x8xi1>
      %cst_45 = arith.constant 0xFF800000 : f32
      %75 = vector.broadcast %cst_45 : f32 to vector<8x8xf32>
      %76 = arith.select %74, %71, %75 : vector<8x8xi1>, vector<8x8xf32>
      %77 = arith.index_cast %68 : i32 to index
      %c0_46 = arith.constant 0 : index
      %78 = vector.load %arg16[%77, %c0_46] : memref<8x8xf32, #tpu.memory_space<vmem>>, vector<8x8xf32>
      tpu.vector_store %arg16[%77, %c0_46], %76 {strides = array<i32>} : memref<8x8xf32, #tpu.memory_space<vmem>>, vector<8x8xf32>,
      %cst_47 = arith.constant dense<0xFF800000> : vector<8xf32>
      %79 = vector.multi_reduction <maximumf>, %76, %cst_47 [0] : vector<8x8xf32> to vector<8xf32>
      %80 = vector.shape_cast %79 : vector<8xf32> to vector<1x8xf32>
      %81 = arith.maximumf %arg18, %80 : vector<1x8xf32>
      %82 = arith.subf %arg18, %81 : vector<1x8xf32>
      %83 = math.exp %82 : vector<1x8xf32>
      %84 = arith.mulf %arg19, %83 : vector<1x8xf32>
      %85 = vector.broadcast %81 : vector<1x8xf32> to vector<8x8xf32>
      %86 = arith.subf %76, %85 : vector<8x8xf32>
      %87 = math.exp %86 : vector<8x8xf32>
      %cst_48 = arith.constant dense<0.000000e+00> : vector<8xf32>
      %88 = vector.multi_reduction <add>, %87, %cst_48 [0] : vector<8x8xf32> to vector<8xf32>
      %89 = vector.shape_cast %88 : vector<8xf32> to vector<1x8xf32>
      %90 = arith.addf %84, %89 : vector<1x8xf32>
      scf.yield %81, %90 : vector<1x8xf32>, vector<1x8xf32>
    }
    %60 = math.log %59#1 : vector<1x8xf32>
    %61 = arith.addf %59#0, %60 : vector<1x8xf32>
    %c0_i32_39 = arith.constant 0 : i32
    %c1_i32_40 = arith.constant 1 : i32
    %62 = arith.subi %c1_i32_40, %arg1 : i32
    %63 = arith.addi %arg1, %62 : i32
    %c1_i32_41 = arith.constant 1 : i32
    scf.for %arg17 = %arg1 to %63 step %c1_i32_41  : i32 {
      %c8_i32 = arith.constant 8 : i32
      %67 = arith.muli %arg17, %c8_i32 : i32
      %68 = tpu.assume_multiple %67, 8 : i32
      %69 = arith.index_cast %68 : i32 to index
      %c0_44 = arith.constant 0 : index
      %70 = vector.load %arg16[%69, %c0_44] : memref<8x8xf32, #tpu.memory_space<vmem>>, vector<8x8xf32>
      %71 = vector.broadcast %61 : vector<1x8xf32> to vector<8x8xf32>
      %72 = arith.subf %70, %71 : vector<8x8xf32>
      %73 = math.exp %72 : vector<8x8xf32>
      %cst_45 = arith.constant dense<0.000000e+00> : vector<8x8xf32>
      %74 = tpu.matmul %73, %54, %cst_45 {dimension_numbers = #tpu.dot_dimension_numbers<[1], [0], [0], [1], [0, 0, 1, 1], [], []>} : vector<8x8xf32>, vector<8x8xf32>, vector<8x8xf32> -> vector<8x8xf32>
      %75 = arith.index_cast %68 : i32 to index
      %c24 = arith.constant 24 : index
      %76 = vector.load %arg15[%75, %c24] : memref<8x32xf32, #tpu.memory_space<vmem>>, vector<8x8xf32>
      %77 = arith.addf %76, %74 : vector<8x8xf32>
      %78 = arith.index_cast %68 : i32 to index
      %c24_46 = arith.constant 24 : index
      %79 = vector.load %arg15[%78, %c24_46] : memref<8x32xf32, #tpu.memory_space<vmem>>, vector<8x8xf32>
      tpu.vector_store %arg15[%78, %c24_46], %77 {strides = array<i32>} : memref<8x32xf32, #tpu.memory_space<vmem>>, vector<8x8xf32>,
    }
    %c0_i32_42 = arith.constant 0 : i32
    %64 = arith.cmpi eq, %arg1, %c0_i32_42 : i32
    %65 = arith.extui %64 : i1 to i32
    %c0_i32_43 = arith.constant 0 : i32
    %66 = arith.cmpi ne, %65, %c0_i32_43 : i32
    scf.if %66 {
      %c0_44 = arith.constant 0 : index
      %c0_45 = arith.constant 0 : index
      %67 = vector.load %arg15[%c0_44, %c0_45] : memref<8x32xf32, #tpu.memory_space<vmem>>, vector<8x32xf32>
      %c0_46 = arith.constant 0 : index
      %c0_47 = arith.constant 0 : index
      %68 = vector.load %arg11[%c0_46, %c0_47] : memref<32x32xf32, #tpu.memory_space<vmem>>, vector<32x32xf32>
      %cst_48 = arith.constant dense<0.000000e+00> : vector<8x32xf32>
      %69 = tpu.matmul %67, %68, %cst_48 {dimension_numbers = #tpu.dot_dimension_numbers<[1], [0], [0], [1], [0, 0, 1, 1], [], []>} : vector<8x32xf32>, vector<32x32xf32>, vector<8x32xf32> -> vector<8x32xf32>
      %c0_49 = arith.constant 0 : index
      %c0_50 = arith.constant 0 : index
      %70 = vector.load %arg12[%c0_49, %c0_50] : memref<1x32xf32, #tpu.memory_space<vmem>>, vector<1x32xf32>
      %71 = vector.broadcast %70 : vector<1x32xf32> to vector<8x32xf32>
      %72 = arith.addf %69, %71 : vector<8x32xf32>
      %c0_51 = arith.constant 0 : index
      %c0_52 = arith.constant 0 : index
      %c0_53 = arith.constant 0 : index
      %73 = vector.load %arg13[%c0_51, %c0_52, %c0_53] : memref<1x8x32xf32, #tpu.memory_space<vmem>>, vector<1x8x32xf32>
      %74 = vector.shape_cast %73 : vector<1x8x32xf32> to vector<8x32xf32>
      %75 = vector.shape_cast %72 : vector<8x32xf32> to vector<1x8x32xf32>
      tpu.vector_store %arg13[%c0_51, %c0_52, %c0_53], %75 {strides = array<i32>} : memref<1x8x32xf32, #tpu.memory_space<vmem>>, vector<1x8x32xf32>,
    } else {
    }
    return
  }
  func.func @transform_0(%arg0: i32, %arg1: i32) -> (i32, i32, i32) {
    %c0_i32 = arith.constant 0 : i32
    %c0_i32_0 = arith.constant 0 : i32
    %c0_i32_1 = arith.constant 0 : i32
    return %arg0, %c0_i32, %c0_i32_0 : i32, i32, i32
  }
  func.func @transform_1(%arg0: i32, %arg1: i32) -> (i32, i32, i32) {
    %c0_i32 = arith.constant 0 : i32
    %c0_i32_0 = arith.constant 0 : i32
    return %arg0, %arg1, %c0_i32 : i32, i32, i32
  }
  func.func @transform_2(%arg0: i32, %arg1: i32) -> (i32, i32, i32) {
    %c0_i32 = arith.constant 0 : i32
    %c0_i32_0 = arith.constant 0 : i32
    return %arg0, %arg1, %c0_i32 : i32, i32, i32
  }
  func.func @transform_3(%arg0: i32, %arg1: i32) -> (i32, i32) {
    %c0_i32 = arith.constant 0 : i32
    %c0_i32_0 = arith.constant 0 : i32
    %c0_i32_1 = arith.constant 0 : i32
    return %c0_i32, %c0_i32_0 : i32, i32
  }
  func.func @transform_4(%arg0: i32, %arg1: i32) -> (i32, i32) {
    %c0_i32 = arith.constant 0 : i32
    %c0_i32_0 = arith.constant 0 : i32
    %c0_i32_1 = arith.constant 0 : i32
    return %c0_i32, %c0_i32_0 : i32, i32
  }
  func.func @transform_5(%arg0: i32, %arg1: i32) -> (i32, i32) {
    %c0_i32 = arith.constant 0 : i32
    %c0_i32_0 = arith.constant 0 : i32
    %c0_i32_1 = arith.constant 0 : i32
    return %c0_i32, %c0_i32_0 : i32, i32
  }
  func.func @transform_6(%arg0: i32, %arg1: i32) -> (i32, i32) {
    %c0_i32 = arith.constant 0 : i32
    %c0_i32_0 = arith.constant 0 : i32
    %c0_i32_1 = arith.constant 0 : i32
    return %c0_i32, %c0_i32_0 : i32, i32
  }
  func.func @transform_7(%arg0: i32, %arg1: i32) -> (i32, i32) {
    %c0_i32 = arith.constant 0 : i32
    %c0_i32_0 = arith.constant 0 : i32
    %c0_i32_1 = arith.constant 0 : i32
    return %c0_i32, %c0_i32_0 : i32, i32
  }
  func.func @transform_8(%arg0: i32, %arg1: i32) -> (i32, i32) {
    %c0_i32 = arith.constant 0 : i32
    %c0_i32_0 = arith.constant 0 : i32
    %c0_i32_1 = arith.constant 0 : i32
    return %c0_i32, %c0_i32_0 : i32, i32
  }
  func.func @transform_9(%arg0: i32, %arg1: i32) -> (i32, i32) {
    %c0_i32 = arith.constant 0 : i32
    %c0_i32_0 = arith.constant 0 : i32
    %c0_i32_1 = arith.constant 0 : i32
    return %c0_i32, %c0_i32_0 : i32, i32
  }
  func.func @transform_10(%arg0: i32, %arg1: i32) -> (i32, i32) {
    %c0_i32 = arith.constant 0 : i32
    %c0_i32_0 = arith.constant 0 : i32
    %c0_i32_1 = arith.constant 0 : i32
    return %c0_i32, %c0_i32_0 : i32, i32
  }
  func.func @transform_11(%arg0: i32, %arg1: i32) -> (i32, i32, i32) {
    %c0_i32 = arith.constant 0 : i32
    %c0_i32_0 = arith.constant 0 : i32
    %c0_i32_1 = arith.constant 0 : i32
    return %arg0, %c0_i32, %c0_i32_0 : i32, i32, i32
  }
}

</mosaic_0001>

<llo_original>
// kernel: tpu_custom_call.1
$region0: #{tpu_custom_call.1}
  #allocation0 [shape = 'u32[]', space=smem, size = 0x4, offset = 0x4, fixed_abs, tag = 'smem constant byte address 0x4 - core index']
  #allocation1 [shape = 'u32[144,128]{1,0:T(1,128)}', space=vmem, size = 0x12000, scoped, tag = 'internal scratch']
  #allocation2 [shape = 'f32[8,32]{1,0:T(8,128)}', space=vmem, size = 0x1000, scoped, tag = 'scratch operand']
  #allocation3 [shape = 'f32[8,32]{1,0:T(8,128)}', space=vmem, size = 0x1000, scoped, tag = 'scratch operand']
  #allocation4 [shape = 'f32[8,8]{1,0:T(8,128)}', space=vmem, size = 0x1000, scoped, tag = 'scratch operand']
  %s0 = inlined_call_operand.hbm [shape: f32[2,8,32], index: 0, kind: input, shape index: {}]
  %s1 = inlined_call_operand.hbm [shape: f32[2,8,32], index: 1, kind: input, shape index: {}]
  %s2 = inlined_call_operand.hbm [shape: f32[2,8,32], index: 2, kind: input, shape index: {}]
  %s3 = inlined_call_operand.hbm [shape: f32[32,32], index: 3, kind: input, shape index: {}]
  %s4 = inlined_call_operand.vmem [shape: f32[1,32], index: 4, kind: input, shape index: {}]
  %s5 = inlined_call_operand.hbm [shape: f32[32,32], index: 5, kind: input, shape index: {}]
  %s6 = inlined_call_operand.vmem [shape: f32[1,32], index: 6, kind: input, shape index: {}]
  %s7 = inlined_call_operand.hbm [shape: f32[32,32], index: 7, kind: input, shape index: {}]
  %s8 = inlined_call_operand.vmem [shape: f32[1,32], index: 8, kind: input, shape index: {}]
  %s9 = inlined_call_operand.hbm [shape: f32[32,32], index: 9, kind: input, shape index: {}]
  %s10 = inlined_call_operand.vmem [shape: f32[1,32], index: 10, kind: input, shape index: {}]
  %s11 = inlined_call_operand.hbm [shape: f32[2,8,32], index: 11, kind: output, shape index: {}]
  %s12 = sld [smem:[#allocation0]]
  $region169: #{tpu_custom_call.1} parent=0
    _
  %s14 = ssub.s32 1, %s12
  %s15 = scalar_select 0, %s14, %s12
  $region1: #{tpu_custom_call.1} parent=0
    #allocation5 [shape = 'u8[8192]{0}', space=vmem, size = 0x2000, scoped, tag = 'input window, operand 0']
    #allocation6 [shape = 's32[2]{0}', space=sflag, size = 0x8, scoped, tag = 'scoped memory for tpu_custom_call.1']
    #allocation7 [shape = 's32[2]{0}', space=sflag, size = 0x8, scoped, tag = 'scoped memory for tpu_custom_call.1']
    #allocation8 [shape = 'u8[8192]{0}', space=vmem, size = 0x2000, scoped, tag = 'input window, operand 1']
    #allocation9 [shape = 's32[2]{0}', space=sflag, size = 0x8, scoped, tag = 'scoped memory for tpu_custom_call.1']
    #allocation10 [shape = 'u8[8192]{0}', space=vmem, size = 0x2000, scoped, tag = 'input window, operand 2']
    #allocation11 [shape = 'u8[16384]{0}', space=vmem, size = 0x4000, scoped, tag = 'input window, operand 3, single buffered']
    #allocation12 [shape = 's32[1]{0}', space=sflag, size = 0x4, scoped, tag = 'scoped memory for tpu_custom_call.1']
    #allocation13 [shape = 'u8[16384]{0}', space=vmem, size = 0x4000, scoped, tag = 'input window, operand 5, single buffered']
    #allocation14 [shape = 'u8[16384]{0}', space=vmem, size = 0x4000, scoped, tag = 'input window, operand 7, single buffered']
    #allocation15 [shape = 's32[1]{0}', space=sflag, size = 0x4, scoped, tag = 'scoped memory for tpu_custom_call.1']
    #allocation16 [shape = 'u8[16384]{0}', space=vmem, size = 0x4000, scoped, tag = 'input window, operand 9, single buffered']
    #allocation17 [shape = 'u8[8192]{0}', space=vmem, size = 0x2000, scoped, tag = 'output window, operand 0']
    %16 = vsyncpa [#allocation6], 0
    %s17 = scalar_lea.sflag [#allocation6], 1
    %18 = vsyncpa %s17, 0
    %19 = vsyncpa [#allocation9], 0
    %s20 = scalar_lea.sflag [#allocation9], 1
    %21 = vsyncpa %s20, 0
    %22 = vsyncpa [#allocation12], 0
    %23 = vsyncpa [#allocation15], 0
    %24 = vsyncpa [#allocation7], 0
    %s25 = scalar_lea.sflag [#allocation7], 1
    %26 = vsyncpa %s25, 0
    loop: start=0, step=1, limit=4
    $region2: #{tpu_custom_call.1} parent=1 // loop_pre_header
      _
    $region3: #{tpu_custom_call.1} parent=1 // loop_header
      %s28 = sphi 0, %s32
      %p29 = scmp.ge.s32.totalorder %s28, 4
      %s35 = sphi 0, %s47
      %s36 = sphi 0, %s43
      %s37 = sphi 0, %s35
      %s38 = sphi 0, %s36
      %s39 = sphi 0, %s37
      %s40 = sphi 0, %s38
      %s50 = sphi 0, %s52
      %s53 = sphi 0, %s50
      %s54 = sphi 0, %s53
      %s70 = sphi 0, %s54
      %s78 = sphi 0, %s80
      %s81 = sphi 0, %s78
      %s82 = sphi 0, %s81
      %s98 = sphi 0, %s82
      %s106 = sphi 0, %s108
      %s109 = sphi 0, %s106
      %s110 = sphi 0, %s109
      %s126 = sphi 0, %s110
      %s130 = sphi 0, %s130
      %s132 = sphi 0, %s130
      %s133 = sphi 0, %s132
      %s147 = sphi 0, %s133
      %s151 = sphi 0, %s151
      %s153 = sphi 0, %s151
      %s154 = sphi 0, %s153
      %s168 = sphi 0, %s154
      %s172 = sphi 0, %s172
      %s174 = sphi 0, %s172
      %s175 = sphi 0, %s174
      %s189 = sphi 0, %s175
      %s193 = sphi 0, %s193
      %s195 = sphi 0, %s193
      %s196 = sphi 0, %s195
      %s210 = sphi 0, %s196
      %s214 = sphi 0, %s214
      %s216 = sphi 0, %s214
      %s217 = sphi 0, %s216
      %s231 = sphi 0, %s217
      %s235 = sphi 0, %s235
      %s237 = sphi 0, %s235
      %s238 = sphi 0, %s237
      %s252 = sphi 0, %s238
      %s256 = sphi 0, %s256
      %s258 = sphi 0, %s256
      %s259 = sphi 0, %s258
      %s273 = sphi 0, %s259
      %s277 = sphi 0, %s277
      %s279 = sphi 0, %s277
      %s280 = sphi 0, %s279
      %s294 = sphi 0, %s280
      %s300 = sphi 0, %s302
      %s303 = sphi 0, %s300
      %s304 = sphi 0, %s303
      %s320 = sphi 0, %s304
    $region4: #{tpu_custom_call.1} parent=1 // loop_header_branch
      %31 = sbr.rel (%p29) target = $region8
    $region5: #{tpu_custom_call.1} parent=1 // loop_body
      %s33 = ssub.s32 %s28, 1
      %s34 = ssub.s32 %s28, 2
      %s41 = sadd.s32 1, %s36
      %p42 = scmp.ge.s32.totalorder %s41, 1
      %s43 = scalar_select %p42, 0, %s41
      %s44 = sadd.s32 1, %s35
      %s45 = scalar_select %p42, %s44, %s35
      %p46 = scmp.ge.s32.totalorder %s45, 2
      %s47 = scalar_select %p46, 0, %s45
      %s48 = ssub.s32 %s35, %s47
      %p49 = scmp.eq.s32.totalorder %s48, 0
      %s51 = sadd.s32 %s50, 1
      %s52 = scalar_select %p49, %s50, %s51
      %p55 = pneg %p49
      %p56 = scmp.eq.s32.totalorder %s28, 1
      %p57 = por %p55, %p56
      %p58 = scmp.ne.s32.totalorder %s50, %s53
      %p59 = scmp.eq.s32.totalorder %s28, 0
      %p60 = por %p58, %p59
      %p61 = scmp.ne.s32.totalorder %s50, %s53
      %p62 = scmp.eq.s32.totalorder %s33, 1
      %p63 = por %p61, %p62
      %p64 = scmp.ne.s32.totalorder %s53, %s54
      %p65 = scmp.eq.s32.totalorder %s33, 0
      %p66 = por %p64, %p65
      %p67 = scmp.ne.s32.totalorder %s53, %s54
      %p68 = scmp.eq.s32.totalorder %s34, 1
      %p69 = por %p67, %p68
      %p71 = scmp.ne.s32.totalorder %s54, %s70
      %p72 = scmp.eq.s32.totalorder %s34, 0
      %p73 = por %p71, %p72
      %s74 = ssub.s32 %s35, %s47
      %s75 = ssub.s32 %s36, %s43
      %s76 = sor.u32 %s74, %s75
      %p77 = scmp.eq.s32.totalorder %s76, 0
      %s79 = sadd.s32 %s78, 1
      %s80 = scalar_select %p77, %s78, %s79
      %p83 = pneg %p77
      %p84 = scmp.eq.s32.totalorder %s28, 1
      %p85 = por %p83, %p84
      %p86 = scmp.ne.s32.totalorder %s78, %s81
      %p87 = scmp.eq.s32.totalorder %s28, 0
      %p88 = por %p86, %p87
      %p89 = scmp.ne.s32.totalorder %s78, %s81
      %p90 = scmp.eq.s32.totalorder %s33, 1
      %p91 = por %p89, %p90
      %p92 = scmp.ne.s32.totalorder %s81, %s82
      %p93 = scmp.eq.s32.totalorder %s33, 0
      %p94 = por %p92, %p93
      %p95 = scmp.ne.s32.totalorder %s81, %s82
      %p96 = scmp.eq.s32.totalorder %s34, 1
      %p97 = por %p95, %p96
      %p99 = scmp.ne.s32.totalorder %s82, %s98
      %p100 = scmp.eq.s32.totalorder %s34, 0
      %p101 = por %p99, %p100
      %s102 = ssub.s32 %s35, %s47
      %s103 = ssub.s32 %s36, %s43
      %s104 = sor.u32 %s102, %s103
      %p105 = scmp.eq.s32.totalorder %s104, 0
      %s107 = sadd.s32 %s106, 1
      %s108 = scalar_select %p105, %s106, %s107
      %p111 = pneg %p105
      %p112 = scmp.eq.s32.totalorder %s28, 1
      %p113 = por %p111, %p112
      %p114 = scmp.ne.s32.totalorder %s106, %s109
      %p115 = scmp.eq.s32.totalorder %s28, 0
      %p116 = por %p114, %p115
      %p117 = scmp.ne.s32.totalorder %s106, %s109
      %p118 = scmp.eq.s32.totalorder %s33, 1
      %p119 = por %p117, %p118
      %p120 = scmp.ne.s32.totalorder %s109, %s110
      %p121 = scmp.eq.s32.totalorder %s33, 0
      %p122 = por %p120, %p121
      %p123 = scmp.ne.s32.totalorder %s109, %s110
      %p124 = scmp.eq.s32.totalorder %s34, 1
      %p125 = por %p123, %p124
      %p127 = scmp.ne.s32.totalorder %s110, %s126
      %p128 = scmp.eq.s32.totalorder %s34, 0
      %p129 = por %p127, %p128
      %s131 = sadd.s32 %s130, 1
      %p134 = scmp.eq.s32.totalorder %s28, 1
      %p135 = scmp.ne.s32.totalorder %s130, %s132
      %p136 = scmp.eq.s32.totalorder %s28, 0
      %p137 = por %p135, %p136
      %p138 = scmp.ne.s32.totalorder %s130, %s132
      %p139 = scmp.eq.s32.totalorder %s33, 1
      %p140 = por %p138, %p139
      %p141 = scmp.ne.s32.totalorder %s132, %s133
      %p142 = scmp.eq.s32.totalorder %s33, 0
      %p143 = por %p141, %p142
      %p144 = scmp.ne.s32.totalorder %s132, %s133
      %p145 = scmp.eq.s32.totalorder %s34, 1
      %p146 = por %p144, %p145
      %p148 = scmp.ne.s32.totalorder %s133, %s147
      %p149 = scmp.eq.s32.totalorder %s34, 0
      %p150 = por %p148, %p149
      %s152 = sadd.s32 %s151, 1
      %p155 = scmp.eq.s32.totalorder %s28, 1
      %p156 = scmp.ne.s32.totalorder %s151, %s153
      %p157 = scmp.eq.s32.totalorder %s28, 0
      %p158 = por %p156, %p157
      %p159 = scmp.ne.s32.totalorder %s151, %s153
      %p160 = scmp.eq.s32.totalorder %s33, 1
      %p161 = por %p159, %p160
      %p162 = scmp.ne.s32.totalorder %s153, %s154
      %p163 = scmp.eq.s32.totalorder %s33, 0
      %p164 = por %p162, %p163
      %p165 = scmp.ne.s32.totalorder %s153, %s154
      %p166 = scmp.eq.s32.totalorder %s34, 1
      %p167 = por %p165, %p166
      %p169 = scmp.ne.s32.totalorder %s154, %s168
      %p170 = scmp.eq.s32.totalorder %s34, 0
      %p171 = por %p169, %p170
      %s173 = sadd.s32 %s172, 1
      %p176 = scmp.eq.s32.totalorder %s28, 1
      %p177 = scmp.ne.s32.totalorder %s172, %s174
      %p178 = scmp.eq.s32.totalorder %s28, 0
      %p179 = por %p177, %p178
      %p180 = scmp.ne.s32.totalorder %s172, %s174
      %p181 = scmp.eq.s32.totalorder %s33, 1
      %p182 = por %p180, %p181
      %p183 = scmp.ne.s32.totalorder %s174, %s175
      %p184 = scmp.eq.s32.totalorder %s33, 0
      %p185 = por %p183, %p184
      %p186 = scmp.ne.s32.totalorder %s174, %s175
      %p187 = scmp.eq.s32.totalorder %s34, 1
      %p188 = por %p186, %p187
      %p190 = scmp.ne.s32.totalorder %s175, %s189
      %p191 = scmp.eq.s32.totalorder %s34, 0
      %p192 = por %p190, %p191
      %s194 = sadd.s32 %s193, 1
      %p197 = scmp.eq.s32.totalorder %s28, 1
      %p198 = scmp.ne.s32.totalorder %s193, %s195
      %p199 = scmp.eq.s32.totalorder %s28, 0
      %p200 = por %p198, %p199
      %p201 = scmp.ne.s32.totalorder %s193, %s195
      %p202 = scmp.eq.s32.totalorder %s33, 1
      %p203 = por %p201, %p202
      %p204 = scmp.ne.s32.totalorder %s195, %s196
      %p205 = scmp.eq.s32.totalorder %s33, 0
      %p206 = por %p204, %p205
      %p207 = scmp.ne.s32.totalorder %s195, %s196
      %p208 = scmp.eq.s32.totalorder %s34, 1
      %p209 = por %p207, %p208
      %p211 = scmp.ne.s32.totalorder %s196, %s210
      %p212 = scmp.eq.s32.totalorder %s34, 0
      %p213 = por %p211, %p212
      %s215 = sadd.s32 %s214, 1
      %p218 = scmp.eq.s32.totalorder %s28, 1
      %p219 = scmp.ne.s32.totalorder %s214, %s216
      %p220 = scmp.eq.s32.totalorder %s28, 0
      %p221 = por %p219, %p220
      %p222 = scmp.ne.s32.totalorder %s214, %s216
      %p223 = scmp.eq.s32.totalorder %s33, 1
      %p224 = por %p222, %p223
      %p225 = scmp.ne.s32.totalorder %s216, %s217
      %p226 = scmp.eq.s32.totalorder %s33, 0
      %p227 = por %p225, %p226
      %p228 = scmp.ne.s32.totalorder %s216, %s217
      %p229 = scmp.eq.s32.totalorder %s34, 1
      %p230 = por %p228, %p229
      %p232 = scmp.ne.s32.totalorder %s217, %s231
      %p233 = scmp.eq.s32.totalorder %s34, 0
      %p234 = por %p232, %p233
      %s236 = sadd.s32 %s235, 1
      %p239 = scmp.eq.s32.totalorder %s28, 1
      %p240 = scmp.ne.s32.totalorder %s235, %s237
      %p241 = scmp.eq.s32.totalorder %s28, 0
      %p242 = por %p240, %p241
      %p243 = scmp.ne.s32.totalorder %s235, %s237
      %p244 = scmp.eq.s32.totalorder %s33, 1
      %p245 = por %p243, %p244
      %p246 = scmp.ne.s32.totalorder %s237, %s238
      %p247 = scmp.eq.s32.totalorder %s33, 0
      %p248 = por %p246, %p247
      %p249 = scmp.ne.s32.totalorder %s237, %s238
      %p250 = scmp.eq.s32.totalorder %s34, 1
      %p251 = por %p249, %p250
      %p253 = scmp.ne.s32.totalorder %s238, %s252
      %p254 = scmp.eq.s32.totalorder %s34, 0
      %p255 = por %p253, %p254
      %s257 = sadd.s32 %s256, 1
      %p260 = scmp.eq.s32.totalorder %s28, 1
      %p261 = scmp.ne.s32.totalorder %s256, %s258
      %p262 = scmp.eq.s32.totalorder %s28, 0
      %p263 = por %p261, %p262
      %p264 = scmp.ne.s32.totalorder %s256, %s258
      %p265 = scmp.eq.s32.totalorder %s33, 1
      %p266 = por %p264, %p265
      %p267 = scmp.ne.s32.totalorder %s258, %s259
      %p268 = scmp.eq.s32.totalorder %s33, 0
      %p269 = por %p267, %p268
      %p270 = scmp.ne.s32.totalorder %s258, %s259
      %p271 = scmp.eq.s32.totalorder %s34, 1
      %p272 = por %p270, %p271
      %p274 = scmp.ne.s32.totalorder %s259, %s273
      %p275 = scmp.eq.s32.totalorder %s34, 0
      %p276 = por %p274, %p275
      %s278 = sadd.s32 %s277, 1
      %p281 = scmp.eq.s32.totalorder %s28, 1
      %p282 = scmp.ne.s32.totalorder %s277, %s279
      %p283 = scmp.eq.s32.totalorder %s28, 0
      %p284 = por %p282, %p283
      %p285 = scmp.ne.s32.totalorder %s277, %s279
      %p286 = scmp.eq.s32.totalorder %s33, 1
      %p287 = por %p285, %p286
      %p288 = scmp.ne.s32.totalorder %s279, %s280
      %p289 = scmp.eq.s32.totalorder %s33, 0
      %p290 = por %p288, %p289
      %p291 = scmp.ne.s32.totalorder %s279, %s280
      %p292 = scmp.eq.s32.totalorder %s34, 1
      %p293 = por %p291, %p292
      %p295 = scmp.ne.s32.totalorder %s280, %s294
      %p296 = scmp.eq.s32.totalorder %s34, 0
      %p297 = por %p295, %p296
      %s298 = ssub.s32 %s35, %s47
      %p299 = scmp.eq.s32.totalorder %s298, 0
      %s301 = sadd.s32 %s300, 1
      %s302 = scalar_select %p299, %s300, %s301
      %p305 = pneg %p299
      %p306 = scmp.eq.s32.totalorder %s28, 1
      %p307 = por %p305, %p306
      %p308 = scmp.ne.s32.totalorder %s300, %s303
      %p309 = scmp.eq.s32.totalorder %s28, 0
      %p310 = por %p308, %p309
      %p311 = scmp.ne.s32.totalorder %s300, %s303
      %p312 = scmp.eq.s32.totalorder %s33, 1
      %p313 = por %p311, %p312
      %p314 = scmp.ne.s32.totalorder %s303, %s304
      %p315 = scmp.eq.s32.totalorder %s33, 0
      %p316 = por %p314, %p315
      %p317 = scmp.ne.s32.totalorder %s303, %s304
      %p318 = scmp.eq.s32.totalorder %s34, 1
      %p319 = por %p317, %p318
      %p321 = scmp.ne.s32.totalorder %s304, %s320
      %p322 = scmp.eq.s32.totalorder %s34, 0
      %p323 = por %p321, %p322
      %p324 = scmp.le.s32.totalorder 1, %s28
      %p325 = scmp.lt.s32.totalorder %s28, 3
      %p326 = pnand %p324, %p325
      %p327 = pneg %p326
      // Predicated region
      $region9: #{tpu_custom_call.1} parent=5 // pred_check
        _
      $region10: #{tpu_custom_call.1} parent=5 // pred_check_branch
        %329 = sbr.rel (%p326) target = $region12
      $region11: #{tpu_custom_call.1} parent=5 // pred_region
        %s330 = ssub.s32 %s28, 1
        // Predicated region
        $region13: #{tpu_custom_call.1} parent=11 // pred_check
          %p331 = pneg %p143
        $region14: #{tpu_custom_call.1} parent=11 // pred_check_branch
          %333 = sbr.rel (%p331) target = $region16
        $region15: #{tpu_custom_call.1} parent=11 // pred_region
          %s335 = ssub.s32 512, 512
          %336 = vsyncadd [#allocation12], %s335
          %s337 = sshll.u32 [#allocation11], 4
          %s338 = int_to_ptr.vmem [resolvable:$true] %s337
          %343 = dma.hbm_to_vmem [thread:$0]  %s3, 512, %s338, [#allocation12], 128, 128, 8
        $region16: #{tpu_custom_call.1} parent=11 // pred_fallthru
          _
        // Predicated region
        $region17: #{tpu_custom_call.1} parent=11 // pred_check
          %p344 = pneg %p164
        $region18: #{tpu_custom_call.1} parent=11 // pred_check_branch
          %346 = sbr.rel (%p344) target = $region20
        $region19: #{tpu_custom_call.1} parent=11 // pred_region
          _
        $region20: #{tpu_custom_call.1} parent=11 // pred_fallthru
          _
        // Predicated region
        $region21: #{tpu_custom_call.1} parent=11 // pred_check
          %p347 = pneg %p185
        $region22: #{tpu_custom_call.1} parent=11 // pred_check_branch
          %349 = sbr.rel (%p347) target = $region24
        $region23: #{tpu_custom_call.1} parent=11 // pred_region
          %s351 = ssub.s32 512, 512
          %352 = vsyncadd [#allocation12], %s351
          %s353 = sshll.u32 [#allocation13], 4
          %s354 = int_to_ptr.vmem [resolvable:$true] %s353
          %359 = dma.hbm_to_vmem [thread:$0]  %s5, 512, %s354, [#allocation12], 128, 128, 8
        $region24: #{tpu_custom_call.1} parent=11 // pred_fallthru
          _
        // Predicated region
        $region25: #{tpu_custom_call.1} parent=11 // pred_check
          %p360 = pneg %p206
        $region26: #{tpu_custom_call.1} parent=11 // pred_check_branch
          %362 = sbr.rel (%p360) target = $region28
        $region27: #{tpu_custom_call.1} parent=11 // pred_region
          _
        $region28: #{tpu_custom_call.1} parent=11 // pred_fallthru
          _
        // Predicated region
        $region29: #{tpu_custom_call.1} parent=11 // pred_check
          %p363 = pneg %p227
        $region30: #{tpu_custom_call.1} parent=11 // pred_check_branch
          %365 = sbr.rel (%p363) target = $region32
        $region31: #{tpu_custom_call.1} parent=11 // pred_region
          %s367 = ssub.s32 512, 512
          %368 = vsyncadd [#allocation15], %s367
          %s369 = sshll.u32 [#allocation14], 4
          %s370 = int_to_ptr.vmem [resolvable:$true] %s369
          %375 = dma.hbm_to_vmem [thread:$0]  %s7, 512, %s370, [#allocation15], 128, 128, 8
        $region32: #{tpu_custom_call.1} parent=11 // pred_fallthru
          _
        // Predicated region
        $region33: #{tpu_custom_call.1} parent=11 // pred_check
          %p376 = pneg %p248
        $region34: #{tpu_custom_call.1} parent=11 // pred_check_branch
          %378 = sbr.rel (%p376) target = $region36
        $region35: #{tpu_custom_call.1} parent=11 // pred_region
          _
        $region36: #{tpu_custom_call.1} parent=11 // pred_fallthru
          _
        // Predicated region
        $region37: #{tpu_custom_call.1} parent=11 // pred_check
          %p379 = pneg %p269
        $region38: #{tpu_custom_call.1} parent=11 // pred_check_branch
          %381 = sbr.rel (%p379) target = $region40
        $region39: #{tpu_custom_call.1} parent=11 // pred_region
          %s383 = ssub.s32 512, 512
          %384 = vsyncadd [#allocation15], %s383
          %s385 = sshll.u32 [#allocation16], 4
          %s386 = int_to_ptr.vmem [resolvable:$true] %s385
          %391 = dma.hbm_to_vmem [thread:$0]  %s9, 512, %s386, [#allocation15], 128, 128, 8
        $region40: #{tpu_custom_call.1} parent=11 // pred_fallthru
          _
        // Predicated region
        $region41: #{tpu_custom_call.1} parent=11 // pred_check
          %p392 = pneg %p290
        $region42: #{tpu_custom_call.1} parent=11 // pred_check_branch
          %394 = sbr.rel (%p392) target = $region44
        $region43: #{tpu_custom_call.1} parent=11 // pred_region
          _
        $region44: #{tpu_custom_call.1} parent=11 // pred_fallthru
          _
      $region12: #{tpu_custom_call.1} parent=5 // pred_fallthru
        _
      %p395 = scmp.lt.s32.totalorder %s28, 2
      // Predicated region
      $region45: #{tpu_custom_call.1} parent=5 // pred_check
        %p396 = pneg %p395
      $region46: #{tpu_custom_call.1} parent=5 // pred_check_branch
        %398 = sbr.rel (%p396) target = $region48
      $region47: #{tpu_custom_call.1} parent=5 // pred_region
        // Predicated region
        $region49: #{tpu_custom_call.1} parent=47 // pred_check
          %p399 = pneg %p60
        $region50: #{tpu_custom_call.1} parent=47 // pred_check_branch
          %401 = sbr.rel (%p399) target = $region52
        $region51: #{tpu_custom_call.1} parent=47 // pred_region
          %s402 = sand.u32 %s50, 1
          %s403 = scalar_lea.sflag [#allocation6], %s402
          %s404 = sand.u32 %s50, 1
          %s405 = smul.addr %s404, 8
          %s406 = scalar_lea.vmem [#allocation5], %s405
          %s408 = ssub.s32 128, 128
          %409 = vsyncadd %s403, %s408
          %s410 = smul.addr %s35, 128
          %s411 = scalar_lea.hbm %s0, %s410
          %s413 = sshll.u32 %s406, 4
          %s414 = int_to_ptr.vmem [resolvable:$true] %s413
          %416 = dma.hbm_to_vmem [thread:$0]  %s411, 128, %s414, %s403
        $region52: #{tpu_custom_call.1} parent=47 // pred_fallthru
          _
        // Predicated region
        $region53: #{tpu_custom_call.1} parent=47 // pred_check
          %p417 = pneg %p88
        $region54: #{tpu_custom_call.1} parent=47 // pred_check_branch
          %419 = sbr.rel (%p417) target = $region56
        $region55: #{tpu_custom_call.1} parent=47 // pred_region
          %s420 = sand.u32 %s28, 1
          %s421 = scalar_lea.sflag [#allocation9], %s420
          %s422 = sand.u32 %s78, 1
          %s423 = smul.addr %s422, 8
          %s424 = scalar_lea.vmem [#allocation8], %s423
          %s426 = ssub.s32 128, 128
          %427 = vsyncadd %s421, %s426
          %s428 = sadd.s32 %s36, %s35
          %s429 = smul.addr %s428, 128
          %s430 = scalar_lea.hbm %s1, %s429
          %s432 = sshll.u32 %s424, 4
          %s433 = int_to_ptr.vmem [resolvable:$true] %s432
          %435 = dma.hbm_to_vmem [thread:$0]  %s430, 128, %s433, %s421
        $region56: #{tpu_custom_call.1} parent=47 // pred_fallthru
          _
        // Predicated region
        $region57: #{tpu_custom_call.1} parent=47 // pred_check
          %p436 = pneg %p116
        $region58: #{tpu_custom_call.1} parent=47 // pred_check_branch
          %438 = sbr.rel (%p436) target = $region60
        $region59: #{tpu_custom_call.1} parent=47 // pred_region
          %s439 = sand.u32 %s28, 1
          %s440 = scalar_lea.sflag [#allocation9], %s439
          %s441 = sand.u32 %s106, 1
          %s442 = smul.addr %s441, 8
          %s443 = scalar_lea.vmem [#allocation10], %s442
          %s445 = ssub.s32 128, 128
          %446 = vsyncadd %s440, %s445
          %s447 = sadd.s32 %s36, %s35
          %s448 = smul.addr %s447, 128
          %s449 = scalar_lea.hbm %s2, %s448
          %s451 = sshll.u32 %s443, 4
          %s452 = int_to_ptr.vmem [resolvable:$true] %s451
          %454 = dma.hbm_to_vmem [thread:$0]  %s449, 128, %s452, %s440
        $region60: #{tpu_custom_call.1} parent=47 // pred_fallthru
          _
      $region48: #{tpu_custom_call.1} parent=5 // pred_fallthru
        _
      %p455 = scmp.le.s32.totalorder 1, %s28
      %p456 = scmp.lt.s32.totalorder %s28, 3
      %p457 = pnand %p455, %p456
      %p458 = pneg %p457
      // Predicated region
      $region61: #{tpu_custom_call.1} parent=5 // pred_check
        _
      $region62: #{tpu_custom_call.1} parent=5 // pred_check_branch
        %460 = sbr.rel (%p457) target = $region64
      $region63: #{tpu_custom_call.1} parent=5 // pred_region
        %s461 = ssub.s32 %s28, 1
        %s462 = sand.u32 %s53, 1
        %s463 = scalar_lea.sflag [#allocation6], %s462
        %s464 = sand.u32 %s53, 1
        %s465 = smul.addr %s464, 8
        %s466 = scalar_lea.vmem [#allocation5], %s465
        // Predicated region
        $region65: #{tpu_custom_call.1} parent=63 // pred_check
          %p467 = pneg %p66
        $region66: #{tpu_custom_call.1} parent=63 // pred_check_branch
          %469 = sbr.rel (%p467) target = $region68
        $region67: #{tpu_custom_call.1} parent=63 // pred_region
          %470 = dma.done %s463, 128
        $region68: #{tpu_custom_call.1} parent=63 // pred_fallthru
          _
        %s471 = sand.u32 %s33, 1
        %s472 = scalar_lea.sflag [#allocation9], %s471
        %s473 = sand.u32 %s81, 1
        %s474 = smul.addr %s473, 8
        %s475 = scalar_lea.vmem [#allocation8], %s474
        // Predicated region
        $region69: #{tpu_custom_call.1} parent=63 // pred_check
          %p476 = pneg %p94
        $region70: #{tpu_custom_call.1} parent=63 // pred_check_branch
          %478 = sbr.rel (%p476) target = $region72
        $region71: #{tpu_custom_call.1} parent=63 // pred_region
          %479 = dma.done %s472, 128
        $region72: #{tpu_custom_call.1} parent=63 // pred_fallthru
          _
        %s480 = sand.u32 %s33, 1
        %s481 = scalar_lea.sflag [#allocation9], %s480
        %s482 = sand.u32 %s109, 1
        %s483 = smul.addr %s482, 8
        %s484 = scalar_lea.vmem [#allocation10], %s483
        // Predicated region
        $region73: #{tpu_custom_call.1} parent=63 // pred_check
          %p485 = pneg %p122
        $region74: #{tpu_custom_call.1} parent=63 // pred_check_branch
          %487 = sbr.rel (%p485) target = $region76
        $region75: #{tpu_custom_call.1} parent=63 // pred_region
          %488 = dma.done %s481, 128
        $region76: #{tpu_custom_call.1} parent=63 // pred_fallthru
          _
        // Predicated region
        $region77: #{tpu_custom_call.1} parent=63 // pred_check
          %p489 = pneg %p143
        $region78: #{tpu_custom_call.1} parent=63 // pred_check_branch
          %491 = sbr.rel (%p489) target = $region80
        $region79: #{tpu_custom_call.1} parent=63 // pred_region
          %492 = dma.done [#allocation12], 512
        $region80: #{tpu_custom_call.1} parent=63 // pred_fallthru
          _
        // Predicated region
        $region81: #{tpu_custom_call.1} parent=63 // pred_check
          %p493 = pneg %p185
        $region82: #{tpu_custom_call.1} parent=63 // pred_check_branch
          %495 = sbr.rel (%p493) target = $region84
        $region83: #{tpu_custom_call.1} parent=63 // pred_region
          %496 = dma.done [#allocation12], 512
        $region84: #{tpu_custom_call.1} parent=63 // pred_fallthru
          _
        // Predicated region
        $region85: #{tpu_custom_call.1} parent=63 // pred_check
          %p497 = pneg %p227
        $region86: #{tpu_custom_call.1} parent=63 // pred_check_branch
          %499 = sbr.rel (%p497) target = $region88
        $region87: #{tpu_custom_call.1} parent=63 // pred_region
          %500 = dma.done [#allocation15], 512
        $region88: #{tpu_custom_call.1} parent=63 // pred_fallthru
          _
        // Predicated region
        $region89: #{tpu_custom_call.1} parent=63 // pred_check
          %p501 = pneg %p269
        $region90: #{tpu_custom_call.1} parent=63 // pred_check_branch
          %503 = sbr.rel (%p501) target = $region92
        $region91: #{tpu_custom_call.1} parent=63 // pred_region
          %504 = dma.done [#allocation15], 512
        $region92: #{tpu_custom_call.1} parent=63 // pred_fallthru
          _
        %s505 = sand.u32 %s53, 1
        %s506 = scalar_lea.sflag [#allocation6], %s505
        %s507 = sand.u32 %s53, 1
        %s508 = smul.addr %s507, 8
        %s509 = scalar_lea.vmem [#allocation5], %s508
        %p510 = pneg %p66
        %p511 = pneg %p63
        %s512 = sand.u32 %s33, 1
        %s513 = scalar_lea.sflag [#allocation9], %s512
        %s514 = sand.u32 %s81, 1
        %s515 = smul.addr %s514, 8
        %s516 = scalar_lea.vmem [#allocation8], %s515
        %p517 = pneg %p94
        %p518 = pneg %p91
        %s519 = sand.u32 %s33, 1
        %s520 = scalar_lea.sflag [#allocation9], %s519
        %s521 = sand.u32 %s109, 1
        %s522 = smul.addr %s521, 8
        %s523 = scalar_lea.vmem [#allocation10], %s522
        %p524 = pneg %p122
        %p525 = pneg %p119
        %p526 = pneg %p143
        %p527 = pneg %p140
        %p528 = pneg %p164
        %p529 = pneg %p161
        %p530 = pneg %p185
        %p531 = pneg %p182
        %p532 = pneg %p206
        %p533 = pneg %p203
        %p534 = pneg %p227
        %p535 = pneg %p224
        %p536 = pneg %p248
        %p537 = pneg %p245
        %p538 = pneg %p269
        %p539 = pneg %p266
        %p540 = pneg %p290
        %p541 = pneg %p287
        %p542 = pneg %p316
        %p543 = pneg %p313
        %s544 = sand.u32 %s303, 1
        %s545 = scalar_lea.sflag [#allocation7], %s544
        %s546 = sand.u32 %s303, 1
        %s547 = smul.addr %s546, 8
        %s548 = scalar_lea.vmem [#allocation17], %s547
        %p549 = scmp.eq.s32.totalorder %s38, 0
        // Predicated region
        $region93: #{tpu_custom_call.1} parent=63 // pred_check
          %p550 = pneg %p549
        $region94: #{tpu_custom_call.1} parent=63 // pred_check_branch
          %552 = sbr.rel (%p550) target = $region96
        $region95: #{tpu_custom_call.1} parent=63 // pred_region
          %vm553 = vcmask 261120
          %554 = vst.msk [vmem:[#allocation3] sm:$0xff] %vm553, 0.0
          %v555 = vld [vmem:[%s466] sm:$0xff]
          %v556 = vld [vmem:[#allocation11] sm:$0xff]
          %v557 = vld [vmem:[#allocation11 + $0x8] sm:$0xff]
          %v558 = vld [vmem:[#allocation11 + $0x10] sm:$0xff]
          %v559 = vld [vmem:[#allocation11 + $0x18] sm:$0xff]
          %v560 = vld [vmem:[%s4] sm:$0x1]
          %v562 = vlaneseq
          %v563 = vshrl.u32 %v562, 7
          %v564 = vsub.s32 0, %v563
          %v565 = vrot.slane %v560, %v564
          %v568 = vsel %vm553, %v555, 0
          %570 = vmatprep.subr.mxu0 0.0
          %571 = vmatpush1.msra.mxu0 0.0
          %572 = vmatprep.subr.mxu0 0.0
          %573 = vmatpush1.msra.mxu0 0.0
          %574 = vmatprep.subr.mxu0 0.0
          %575 = vmatpush1.msra.mxu0 0.0
          %576 = vmatprep.subr.mxu0 0.0
          %577 = vmatpush1.msra.mxu0 0.0
          %578 = vmatprep.subr.mxu0 0.0
          %579 = vmatpush1.msra.mxu0 0.0
          %580 = vmatprep.subr.mxu0 0.0
          %581 = vmatpush1.msra.mxu0 0.0
          %582 = vmatprep.subr.mxu0 0.0
          %583 = vmatpush1.msra.mxu0 0.0
          %584 = vmatprep.subr.mxu0 0.0
          %585 = vmatpush1.msra.mxu0 0.0
          %586 = vmatprep.subr.mxu0 0.0
          %587 = vmatpush1.msra.mxu0 0.0
          %588 = vmatprep.subr.mxu0 0.0
          %589 = vmatpush1.msra.mxu0 0.0
          %590 = vmatprep.subr.mxu0 0.0
          %591 = vmatpush1.msra.mxu0 0.0
          %592 = vmatprep.subr.mxu0 0.0
          %593 = vmatpush1.msra.mxu0 0.0
          %594 = vmatprep.subr.mxu0 0.0
          %595 = vmatpush1.msra.mxu0 %v559
          %596 = vmatprep.subr.mxu0 0.0
          %597 = vmatpush1.msra.mxu0 %v558
          %598 = vmatprep.subr.mxu0 0.0
          %599 = vmatpush1.msra.mxu0 %v557
          %600 = vmatprep.subr.mxu0 0.0
          %601 = vmatpush1.msra.mxu0 %v556
          %602 = vmatprep.subr.mxu0 0.0
          %603 = vmatpush2.msra.mxu0 0.0
          %604 = vmatprep.subr.mxu0 0.0
          %605 = vmatpush2.msra.mxu0 0.0
          %606 = vmatprep.subr.mxu0 0.0
          %607 = vmatpush2.msra.mxu0 0.0
          %608 = vmatprep.subr.mxu0 0.0
          %609 = vmatpush2.msra.mxu0 0.0
          %610 = vmatprep.subr.mxu0 0.0
          %611 = vmatpush2.msra.mxu0 0.0
          %612 = vmatprep.subr.mxu0 0.0
          %613 = vmatpush2.msra.mxu0 0.0
          %614 = vmatprep.subr.mxu0 0.0
          %615 = vmatpush2.msra.mxu0 0.0
          %616 = vmatprep.subr.mxu0 0.0
          %617 = vmatpush2.msra.mxu0 0.0
          %618 = vmatprep.subr.mxu0 0.0
          %619 = vmatpush2.msra.mxu0 0.0
          %620 = vmatprep.subr.mxu0 0.0
          %621 = vmatpush2.msra.mxu0 0.0
          %622 = vmatprep.subr.mxu0 0.0
          %623 = vmatpush2.msra.mxu0 0.0
          %624 = vmatprep.subr.mxu0 0.0
          %625 = vmatpush2.msra.mxu0 0.0
          %626 = vmatprep.subr.mxu0 0.0
          %627 = vmatpush2.msra.mxu0 0.0
          %628 = vmatprep.subr.mxu0 0.0
          %629 = vmatpush2.msra.mxu0 0.0
          %630 = vmatprep.subr.mxu0 0.0
          %631 = vmatpush2.msra.mxu0 0.0
          %632 = vmatprep.subr.mxu0 0.0
          %633 = vmatpush2.msra.mxu0 0.0
          %634 = vmatprep.mubr.f32.mxu0 0.0
          %635 = vmatmul.mubr.f32.gmra.mxu0 %v568
          %v636 = vpop.f32.mrf.mxu0
          %v637 = vadd.f32 %v565, %v636
          %v638 = vpop.f32.mrf.mxu0
          %639 = vdwg.mxu0
          %640 = vst.msk [vmem:[#allocation2] sm:$0xff] %vm553, %v637
        $region96: #{tpu_custom_call.1} parent=63 // pred_fallthru
          _
        %v641 = vld [vmem:[%s475] sm:$0xff]
        %v642 = vld [vmem:[#allocation13] sm:$0xff]
        %v643 = vld [vmem:[#allocation13 + $0x8] sm:$0xff]
        %v644 = vld [vmem:[#allocation13 + $0x10] sm:$0xff]
        %v645 = vld [vmem:[#allocation13 + $0x18] sm:$0xff]
        %v646 = vld [vmem:[%s6] sm:$0x1]
        %v648 = vlaneseq
        %v649 = vshrl.u32 %v648, 7
        %v650 = vsub.s32 0, %v649
        %v651 = vrot.slane %v646, %v650
        %vm653 = vcmask 261120
        %v655 = vsel %vm653, %v641, 0
        %657 = vmatprep.subr.mxu0 0.0
        %658 = vmatpush1.msra.mxu0 0.0
        %659 = vmatprep.subr.mxu0 0.0
        %660 = vmatpush1.msra.mxu0 0.0
        %661 = vmatprep.subr.mxu0 0.0
        %662 = vmatpush1.msra.mxu0 0.0
        %663 = vmatprep.subr.mxu0 0.0
        %664 = vmatpush1.msra.mxu0 0.0
        %665 = vmatprep.subr.mxu0 0.0
        %666 = vmatpush1.msra.mxu0 0.0
        %667 = vmatprep.subr.mxu0 0.0
        %668 = vmatpush1.msra.mxu0 0.0
        %669 = vmatprep.subr.mxu0 0.0
        %670 = vmatpush1.msra.mxu0 0.0
        %671 = vmatprep.subr.mxu0 0.0
        %672 = vmatpush1.msra.mxu0 0.0
        %673 = vmatprep.subr.mxu0 0.0
        %674 = vmatpush1.msra.mxu0 0.0
        %675 = vmatprep.subr.mxu0 0.0
        %676 = vmatpush1.msra.mxu0 0.0
        %677 = vmatprep.subr.mxu0 0.0
        %678 = vmatpush1.msra.mxu0 0.0
        %679 = vmatprep.subr.mxu0 0.0
        %680 = vmatpush1.msra.mxu0 0.0
        %681 = vmatprep.subr.mxu0 0.0
        %682 = vmatpush1.msra.mxu0 %v645
        %683 = vmatprep.subr.mxu0 0.0
        %684 = vmatpush1.msra.mxu0 %v644
        %685 = vmatprep.subr.mxu0 0.0
        %686 = vmatpush1.msra.mxu0 %v643
        %687 = vmatprep.subr.mxu0 0.0
        %688 = vmatpush1.msra.mxu0 %v642
        %689 = vmatprep.subr.mxu0 0.0
        %690 = vmatpush2.msra.mxu0 0.0
        %691 = vmatprep.subr.mxu0 0.0
        %692 = vmatpush2.msra.mxu0 0.0
        %693 = vmatprep.subr.mxu0 0.0
        %694 = vmatpush2.msra.mxu0 0.0
        %695 = vmatprep.subr.mxu0 0.0
        %696 = vmatpush2.msra.mxu0 0.0
        %697 = vmatprep.subr.mxu0 0.0
        %698 = vmatpush2.msra.mxu0 0.0
        %699 = vmatprep.subr.mxu0 0.0
        %700 = vmatpush2.msra.mxu0 0.0
        %701 = vmatprep.subr.mxu0 0.0
        %702 = vmatpush2.msra.mxu0 0.0
        %703 = vmatprep.subr.mxu0 0.0
        %704 = vmatpush2.msra.mxu0 0.0
        %705 = vmatprep.subr.mxu0 0.0
        %706 = vmatpush2.msra.mxu0 0.0
        %707 = vmatprep.subr.mxu0 0.0
        %708 = vmatpush2.msra.mxu0 0.0
        %709 = vmatprep.subr.mxu0 0.0
        %710 = vmatpush2.msra.mxu0 0.0
        %711 = vmatprep.subr.mxu0 0.0
        %712 = vmatpush2.msra.mxu0 0.0
        %713 = vmatprep.subr.mxu0 0.0
        %714 = vmatpush2.msra.mxu0 0.0
        %715 = vmatprep.subr.mxu0 0.0
        %716 = vmatpush2.msra.mxu0 0.0
        %717 = vmatprep.subr.mxu0 0.0
        %718 = vmatpush2.msra.mxu0 0.0
        %719 = vmatprep.subr.mxu0 0.0
        %720 = vmatpush2.msra.mxu0 0.0
        %721 = vmatprep.mubr.f32.mxu0 0.0
        %722 = vmatmul.mubr.f32.gmra.mxu0 %v655
        %v723 = vpop.f32.mrf.mxu0
        %v724 = vadd.f32 %v651, %v723
        %v725 = vpop.f32.mrf.mxu0
        %726 = vdwg.mxu0
        %v727 = vld [vmem:[%s484] sm:$0xff]
        %v728 = vld [vmem:[#allocation14] sm:$0xff]
        %v729 = vld [vmem:[#allocation14 + $0x8] sm:$0xff]
        %v730 = vld [vmem:[#allocation14 + $0x10] sm:$0xff]
        %v731 = vld [vmem:[#allocation14 + $0x18] sm:$0xff]
        %v732 = vld [vmem:[%s8] sm:$0x1]
        %v734 = vlaneseq
        %v735 = vshrl.u32 %v734, 7
        %v736 = vsub.s32 0, %v735
        %v737 = vrot.slane %v732, %v736
        %v740 = vsel %vm653, %v727, 0
        %742 = vmatprep.subr.mxu0 0.0
        %743 = vmatpush1.msra.mxu0 0.0
        %744 = vmatprep.subr.mxu0 0.0
        %745 = vmatpush1.msra.mxu0 0.0
        %746 = vmatprep.subr.mxu0 0.0
        %747 = vmatpush1.msra.mxu0 0.0
        %748 = vmatprep.subr.mxu0 0.0
        %749 = vmatpush1.msra.mxu0 0.0
        %750 = vmatprep.subr.mxu0 0.0
        %751 = vmatpush1.msra.mxu0 0.0
        %752 = vmatprep.subr.mxu0 0.0
        %753 = vmatpush1.msra.mxu0 0.0
        %754 = vmatprep.subr.mxu0 0.0
        %755 = vmatpush1.msra.mxu0 0.0
        %756 = vmatprep.subr.mxu0 0.0
        %757 = vmatpush1.msra.mxu0 0.0
        %758 = vmatprep.subr.mxu0 0.0
        %759 = vmatpush1.msra.mxu0 0.0
        %760 = vmatprep.subr.mxu0 0.0
        %761 = vmatpush1.msra.mxu0 0.0
        %762 = vmatprep.subr.mxu0 0.0
        %763 = vmatpush1.msra.mxu0 0.0
        %764 = vmatprep.subr.mxu0 0.0
        %765 = vmatpush1.msra.mxu0 0.0
        %766 = vmatprep.subr.mxu0 0.0
        %767 = vmatpush1.msra.mxu0 %v731
        %768 = vmatprep.subr.mxu0 0.0
        %769 = vmatpush1.msra.mxu0 %v730
        %770 = vmatprep.subr.mxu0 0.0
        %771 = vmatpush1.msra.mxu0 %v729
        %772 = vmatprep.subr.mxu0 0.0
        %773 = vmatpush1.msra.mxu0 %v728
        %774 = vmatprep.subr.mxu0 0.0
        %775 = vmatpush2.msra.mxu0 0.0
        %776 = vmatprep.subr.mxu0 0.0
        %777 = vmatpush2.msra.mxu0 0.0
        %778 = vmatprep.subr.mxu0 0.0
        %779 = vmatpush2.msra.mxu0 0.0
        %780 = vmatprep.subr.mxu0 0.0
        %781 = vmatpush2.msra.mxu0 0.0
        %782 = vmatprep.subr.mxu0 0.0
        %783 = vmatpush2.msra.mxu0 0.0
        %784 = vmatprep.subr.mxu0 0.0
        %785 = vmatpush2.msra.mxu0 0.0
        %786 = vmatprep.subr.mxu0 0.0
        %787 = vmatpush2.msra.mxu0 0.0
        %788 = vmatprep.subr.mxu0 0.0
        %789 = vmatpush2.msra.mxu0 0.0
        %790 = vmatprep.subr.mxu0 0.0
        %791 = vmatpush2.msra.mxu0 0.0
        %792 = vmatprep.subr.mxu0 0.0
        %793 = vmatpush2.msra.mxu0 0.0
        %794 = vmatprep.subr.mxu0 0.0
        %795 = vmatpush2.msra.mxu0 0.0
        %796 = vmatprep.subr.mxu0 0.0
        %797 = vmatpush2.msra.mxu0 0.0
        %798 = vmatprep.subr.mxu0 0.0
        %799 = vmatpush2.msra.mxu0 0.0
        %800 = vmatprep.subr.mxu0 0.0
        %801 = vmatpush2.msra.mxu0 0.0
        %802 = vmatprep.subr.mxu0 0.0
        %803 = vmatpush2.msra.mxu0 0.0
        %804 = vmatprep.subr.mxu0 0.0
        %805 = vmatpush2.msra.mxu0 0.0
        %806 = vmatprep.mubr.f32.mxu0 0.0
        %807 = vmatmul.mubr.f32.gmra.mxu0 %v740
        %v808 = vpop.f32.mrf.mxu0
        %v809 = vadd.f32 %v737, %v808
        %v810 = vpop.f32.mrf.mxu0
        %811 = vdwg.mxu0
        %v812 = vlaneseq
        %v813 = vshrl.u32 %v812, 7
        %v814 = vlaneseq
        %v815 = vand.u32 %v814, 127
        %vm816 = vcmp.le.s32.totalorder %v815, %v813
        // While loop
        $region97: #{tpu_custom_call.1} parent=63 // loop_pre_header
          _
        $region98: #{tpu_custom_call.1} parent=63 // loop_header
          %s818 = sphi %s38, %s820
          %p819 = scmp.ge.s32.totalorder %s818, 1
          %v823 = vphi -inf, %v920
          %v824 = vphi 0.0, %v935
        $region99: #{tpu_custom_call.1} parent=63 // loop_header_branch
          %822 = sbr.rel (%p819) target = $region103
        $region100: #{tpu_custom_call.1} parent=63 // loop_body
          %s825 = smul.u32 %s818, 8
          %s826 = scalar_lea.vmem [#allocation2], %s825
          %v827 = vld [vmem:[%s826] sm:$0xff]
          %vm828 = vcmask 64512
          %v830 = vsel %vm828, %v827, 0
          %v833 = vsel %vm828, %v724, 0
          %835 = vmatprep.subr.mxu0 0.0
          %836 = vmatpush1.xpose.msra.mxu0 0.0
          %837 = vmatprep.subr.mxu0 0.0
          %838 = vmatpush1.xpose.msra.mxu0 0.0
          %839 = vmatprep.subr.mxu0 0.0
          %840 = vmatpush1.xpose.msra.mxu0 0.0
          %841 = vmatprep.subr.mxu0 0.0
          %842 = vmatpush1.xpose.msra.mxu0 0.0
          %843 = vmatprep.subr.mxu0 0.0
          %844 = vmatpush1.xpose.msra.mxu0 0.0
          %845 = vmatprep.subr.mxu0 0.0
          %846 = vmatpush1.xpose.msra.mxu0 0.0
          %847 = vmatprep.subr.mxu0 0.0
          %848 = vmatpush1.xpose.msra.mxu0 0.0
          %849 = vmatprep.subr.mxu0 0.0
          %850 = vmatpush1.xpose.msra.mxu0 0.0
          %851 = vmatprep.subr.mxu0 0.0
          %852 = vmatpush1.xpose.msra.mxu0 0.0
          %853 = vmatprep.subr.mxu0 0.0
          %854 = vmatpush1.xpose.msra.mxu0 0.0
          %855 = vmatprep.subr.mxu0 0.0
          %856 = vmatpush1.xpose.msra.mxu0 0.0
          %857 = vmatprep.subr.mxu0 0.0
          %858 = vmatpush1.xpose.msra.mxu0 0.0
          %859 = vmatprep.subr.mxu0 0.0
          %860 = vmatpush1.xpose.msra.mxu0 0.0
          %861 = vmatprep.subr.mxu0 0.0
          %862 = vmatpush1.xpose.msra.mxu0 0.0
          %863 = vmatprep.subr.mxu0 0.0
          %864 = vmatpush1.xpose.msra.mxu0 0.0
          %865 = vmatprep.subr.mxu0 0.0
          %866 = vmatpush1.xpose.msra.mxu0 %v833
          %867 = vmatprep.subr.mxu0 0.0
          %868 = vmatpush2.xpose.msra.mxu0 0.0
          %869 = vmatprep.subr.mxu0 0.0
          %870 = vmatpush2.xpose.msra.mxu0 0.0
          %871 = vmatprep.subr.mxu0 0.0
          %872 = vmatpush2.xpose.msra.mxu0 0.0
          %873 = vmatprep.subr.mxu0 0.0
          %874 = vmatpush2.xpose.msra.mxu0 0.0
          %875 = vmatprep.subr.mxu0 0.0
          %876 = vmatpush2.xpose.msra.mxu0 0.0
          %877 = vmatprep.subr.mxu0 0.0
          %878 = vmatpush2.xpose.msra.mxu0 0.0
          %879 = vmatprep.subr.mxu0 0.0
          %880 = vmatpush2.xpose.msra.mxu0 0.0
          %881 = vmatprep.subr.mxu0 0.0
          %882 = vmatpush2.xpose.msra.mxu0 0.0
          %883 = vmatprep.subr.mxu0 0.0
          %884 = vmatpush2.xpose.msra.mxu0 0.0
          %885 = vmatprep.subr.mxu0 0.0
          %886 = vmatpush2.xpose.msra.mxu0 0.0
          %887 = vmatprep.subr.mxu0 0.0
          %888 = vmatpush2.xpose.msra.mxu0 0.0
          %889 = vmatprep.subr.mxu0 0.0
          %890 = vmatpush2.xpose.msra.mxu0 0.0
          %891 = vmatprep.subr.mxu0 0.0
          %892 = vmatpush2.xpose.msra.mxu0 0.0
          %893 = vmatprep.subr.mxu0 0.0
          %894 = vmatpush2.xpose.msra.mxu0 0.0
          %895 = vmatprep.subr.mxu0 0.0
          %896 = vmatpush2.xpose.msra.mxu0 0.0
          %897 = vmatprep.subr.mxu0 0.0
          %898 = vmatpush2.xpose.msra.mxu0 0.0
          %899 = vmatprep.mubr.f32.mxu0 0.0
          %900 = vmatmul.mubr.f32.gmra.mxu0 %v830
          %v901 = vpop.f32.mrf.mxu0
          %v902 = vadd.f32 0.0, %v901
          %v903 = vpop.f32.mrf.mxu0
          %904 = vdwg.mxu0
          %p905 = scmp.gt.s32.totalorder %s818, %s38
          %s906 = scalar_select %p905, 1, 0
          %v907 = vstv %s906
          %vm908 = vcmp.eq.s32.totalorder %v907, 1
          %vm909 = vmor %vm908, %vm816
          %v910 = vsel %vm909, %v902, -inf
          %s911 = scalar_lea.vmem [#allocation4], %s825
          %912 = vst.msk [vmem:[%s911] sm:$0xff] %vm828, %v910
          %v913 = vsel %vm828, %v910, -inf
          %v914 = vrot.slane %v913, 4
          %v915 = vmax.f32 %v913, %v914
          %v916 = vrot.slane %v915, 2
          %v917 = vmax.f32 %v915, %v916
          %v918 = vrot.slane %v917, 1
          %v919 = vmax.f32 %v917, %v918
          %v920 = vmax.f32 %v823, %v919
          %v921 = vsub.f32 %v823, %v920
          %v922 = vmul.f32 %v921, 1.442695
          %v923 = vpow.pop %v922
          %v924 = vmul.f32 %v824, %v923
          %v925 = vsub.f32 %v910, %v920
          %v926 = vmul.f32 %v925, 1.442695
          %v927 = vpow.pop %v926
          %v928 = vsel %vm828, %v927, 0.0
          %v929 = vrot.slane %v928, 4
          %v930 = vadd.f32 %v928, %v929
          %v931 = vrot.slane %v930, 2
          %v932 = vadd.f32 %v930, %v931
          %v933 = vrot.slane %v932, 1
          %v934 = vadd.f32 %v932, %v933
          %v935 = vadd.f32 %v924, %v934
        $region101: #{tpu_custom_call.1} parent=63 // loop_footer
          %s820 = sadd.s32 %s818, 1
        $region102: #{tpu_custom_call.1} parent=63 // loop_footer_branch
          %817 = sbr.rel target = $region98
        $region103: #{tpu_custom_call.1} parent=63 // loop_exit
          _
        %v936 = vlog2.pop %v824
        %v937 = vmul.f32 %v936, 0.6931472
        %v938 = vadd.f32 %v823, %v937
        // While loop
        $region104: #{tpu_custom_call.1} parent=63 // loop_pre_header
          _
        $region105: #{tpu_custom_call.1} parent=63 // loop_header
          %s940 = sphi %s38, %s942
          %p941 = scmp.ge.s32.totalorder %s940, 1
        $region106: #{tpu_custom_call.1} parent=63 // loop_header_branch
          %944 = sbr.rel (%p941) target = $region110
        $region107: #{tpu_custom_call.1} parent=63 // loop_body
          %s945 = smul.u32 %s940, 8
          %s946 = scalar_lea.vmem [#allocation4], %s945
          %v947 = vld [vmem:[%s946] sm:$0xff]
          %v948 = vsub.f32 %v947, %v938
          %v949 = vmul.f32 %v948, 1.442695
          %v950 = vpow.pop %v949
          %vm951 = vcmask 64512
          %v953 = vsel %vm951, %v950, 0
          %955 = vmatprep.subr.mxu0 0.0
          %956 = vmatpush1.msra.mxu0 0.0
          %957 = vmatprep.subr.mxu0 0.0
          %958 = vmatpush1.msra.mxu0 0.0
          %959 = vmatprep.subr.mxu0 0.0
          %960 = vmatpush1.msra.mxu0 0.0
          %961 = vmatprep.subr.mxu0 0.0
          %962 = vmatpush1.msra.mxu0 0.0
          %963 = vmatprep.subr.mxu0 0.0
          %964 = vmatpush1.msra.mxu0 0.0
          %965 = vmatprep.subr.mxu0 0.0
          %966 = vmatpush1.msra.mxu0 0.0
          %967 = vmatprep.subr.mxu0 0.0
          %968 = vmatpush1.msra.mxu0 0.0
          %969 = vmatprep.subr.mxu0 0.0
          %970 = vmatpush1.msra.mxu0 0.0
          %971 = vmatprep.subr.mxu0 0.0
          %972 = vmatpush1.msra.mxu0 0.0
          %973 = vmatprep.subr.mxu0 0.0
          %974 = vmatpush1.msra.mxu0 0.0
          %975 = vmatprep.subr.mxu0 0.0
          %976 = vmatpush1.msra.mxu0 0.0
          %977 = vmatprep.subr.mxu0 0.0
          %978 = vmatpush1.msra.mxu0 0.0
          %979 = vmatprep.subr.mxu0 0.0
          %980 = vmatpush1.msra.mxu0 0.0
          %981 = vmatprep.subr.mxu0 0.0
          %982 = vmatpush1.msra.mxu0 0.0
          %983 = vmatprep.subr.mxu0 0.0
          %984 = vmatpush1.msra.mxu0 0.0
          %985 = vmatprep.subr.mxu0 0.0
          %986 = vmatpush1.msra.mxu0 %v809
          %987 = vmatprep.subr.mxu0 0.0
          %988 = vmatpush2.msra.mxu0 0.0
          %989 = vmatprep.subr.mxu0 0.0
          %990 = vmatpush2.msra.mxu0 0.0
          %991 = vmatprep.subr.mxu0 0.0
          %992 = vmatpush2.msra.mxu0 0.0
          %993 = vmatprep.subr.mxu0 0.0
          %994 = vmatpush2.msra.mxu0 0.0
          %995 = vmatprep.subr.mxu0 0.0
          %996 = vmatpush2.msra.mxu0 0.0
          %997 = vmatprep.subr.mxu0 0.0
          %998 = vmatpush2.msra.mxu0 0.0
          %999 = vmatprep.subr.mxu0 0.0
          %1000 = vmatpush2.msra.mxu0 0.0
          %1001 = vmatprep.subr.mxu0 0.0
          %1002 = vmatpush2.msra.mxu0 0.0
          %1003 = vmatprep.subr.mxu0 0.0
          %1004 = vmatpush2.msra.mxu0 0.0
          %1005 = vmatprep.subr.mxu0 0.0
          %1006 = vmatpush2.msra.mxu0 0.0
          %1007 = vmatprep.subr.mxu0 0.0
          %1008 = vmatpush2.msra.mxu0 0.0
          %1009 = vmatprep.subr.mxu0 0.0
          %1010 = vmatpush2.msra.mxu0 0.0
          %1011 = vmatprep.subr.mxu0 0.0
          %1012 = vmatpush2.msra.mxu0 0.0
          %1013 = vmatprep.subr.mxu0 0.0
          %1014 = vmatpush2.msra.mxu0 0.0
          %1015 = vmatprep.subr.mxu0 0.0
          %1016 = vmatpush2.msra.mxu0 0.0
          %1017 = vmatprep.subr.mxu0 0.0
          %1018 = vmatpush2.msra.mxu0 0.0
          %1019 = vmatprep.mubr.f32.mxu0 0.0
          %1020 = vmatmul.mubr.f32.gmra.mxu0 %v953
          %v1021 = vpop.f32.mrf.mxu0
          %v1022 = vadd.f32 0.0, %v1021
          %v1023 = vpop.f32.mrf.mxu0
          %1024 = vdwg.mxu0
          %s1025 = scalar_lea.vmem [#allocation3], %s945
          %v1026 = vld [vmem:[%s1025] sm:$0xff]
          %v1027 = vadd.f32 %v1026, %v1022
          %1028 = vst.msk [vmem:[%s1025] sm:$0xff] %vm951, %v1027
        $region108: #{tpu_custom_call.1} parent=63 // loop_footer
          %s942 = sadd.s32 %s940, 1
        $region109: #{tpu_custom_call.1} parent=63 // loop_footer_branch
          %939 = sbr.rel target = $region105
        $region110: #{tpu_custom_call.1} parent=63 // loop_exit
          _
        // While loop
        $region111: #{tpu_custom_call.1} parent=63 // loop_pre_header
          _
        $region112: #{tpu_custom_call.1} parent=63 // loop_header
          %s1030 = sphi %s38, %s1032
          %p1031 = scmp.ge.s32.totalorder %s1030, 1
          %v1035 = vphi -inf, %v1136
          %v1036 = vphi 0.0, %v1151
        $region113: #{tpu_custom_call.1} parent=63 // loop_header_branch
          %1034 = sbr.rel (%p1031) target = $region117
        $region114: #{tpu_custom_call.1} parent=63 // loop_body
          %s1037 = smul.u32 %s1030, 8
          %s1038 = scalar_lea.vmem [#allocation2], %s1037
          %v1039 = vld [vmem:[%s1038] sm:$0xff]
          %1041 = vrot.lane.b32.xlu0 %v1039, 120
          %v1042 = vpop.permute.xlu0 %1041
          %1044 = vrot.lane.b32.xlu0 %v724, 120
          %v1045 = vpop.permute.xlu0 %1044
          %vm1046 = vcmask 64512
          %v1047 = vsel %vm1046, %v1042, 0
          %v1049 = vsel %vm1046, %v1045, 0
          %1051 = vmatprep.subr.mxu0 0.0
          %1052 = vmatpush1.xpose.msra.mxu0 0.0
          %1053 = vmatprep.subr.mxu0 0.0
          %1054 = vmatpush1.xpose.msra.mxu0 0.0
          %1055 = vmatprep.subr.mxu0 0.0
          %1056 = vmatpush1.xpose.msra.mxu0 0.0
          %1057 = vmatprep.subr.mxu0 0.0
          %1058 = vmatpush1.xpose.msra.mxu0 0.0
          %1059 = vmatprep.subr.mxu0 0.0
          %1060 = vmatpush1.xpose.msra.mxu0 0.0
          %1061 = vmatprep.subr.mxu0 0.0
          %1062 = vmatpush1.xpose.msra.mxu0 0.0
          %1063 = vmatprep.subr.mxu0 0.0
          %1064 = vmatpush1.xpose.msra.mxu0 0.0
          %1065 = vmatprep.subr.mxu0 0.0
          %1066 = vmatpush1.xpose.msra.mxu0 0.0
          %1067 = vmatprep.subr.mxu0 0.0
          %1068 = vmatpush1.xpose.msra.mxu0 0.0
          %1069 = vmatprep.subr.mxu0 0.0
          %1070 = vmatpush1.xpose.msra.mxu0 0.0
          %1071 = vmatprep.subr.mxu0 0.0
          %1072 = vmatpush1.xpose.msra.mxu0 0.0
          %1073 = vmatprep.subr.mxu0 0.0
          %1074 = vmatpush1.xpose.msra.mxu0 0.0
          %1075 = vmatprep.subr.mxu0 0.0
          %1076 = vmatpush1.xpose.msra.mxu0 0.0
          %1077 = vmatprep.subr.mxu0 0.0
          %1078 = vmatpush1.xpose.msra.mxu0 0.0
          %1079 = vmatprep.subr.mxu0 0.0
          %1080 = vmatpush1.xpose.msra.mxu0 0.0
          %1081 = vmatprep.subr.mxu0 0.0
          %1082 = vmatpush1.xpose.msra.mxu0 %v1049
          %1083 = vmatprep.subr.mxu0 0.0
          %1084 = vmatpush2.xpose.msra.mxu0 0.0
          %1085 = vmatprep.subr.mxu0 0.0
          %1086 = vmatpush2.xpose.msra.mxu0 0.0
          %1087 = vmatprep.subr.mxu0 0.0
          %1088 = vmatpush2.xpose.msra.mxu0 0.0
          %1089 = vmatprep.subr.mxu0 0.0
          %1090 = vmatpush2.xpose.msra.mxu0 0.0
          %1091 = vmatprep.subr.mxu0 0.0
          %1092 = vmatpush2.xpose.msra.mxu0 0.0
          %1093 = vmatprep.subr.mxu0 0.0
          %1094 = vmatpush2.xpose.msra.mxu0 0.0
          %1095 = vmatprep.subr.mxu0 0.0
          %1096 = vmatpush2.xpose.msra.mxu0 0.0
          %1097 = vmatprep.subr.mxu0 0.0
          %1098 = vmatpush2.xpose.msra.mxu0 0.0
          %1099 = vmatprep.subr.mxu0 0.0
          %1100 = vmatpush2.xpose.msra.mxu0 0.0
          %1101 = vmatprep.subr.mxu0 0.0
          %1102 = vmatpush2.xpose.msra.mxu0 0.0
          %1103 = vmatprep.subr.mxu0 0.0
          %1104 = vmatpush2.xpose.msra.mxu0 0.0
          %1105 = vmatprep.subr.mxu0 0.0
          %1106 = vmatpush2.xpose.msra.mxu0 0.0
          %1107 = vmatprep.subr.mxu0 0.0
          %1108 = vmatpush2.xpose.msra.mxu0 0.0
          %1109 = vmatprep.subr.mxu0 0.0
          %1110 = vmatpush2.xpose.msra.mxu0 0.0
          %1111 = vmatprep.subr.mxu0 0.0
          %1112 = vmatpush2.xpose.msra.mxu0 0.0
          %1113 = vmatprep.subr.mxu0 0.0
          %1114 = vmatpush2.xpose.msra.mxu0 0.0
          %1115 = vmatprep.mubr.f32.mxu0 0.0
          %1116 = vmatmul.mubr.f32.gmra.mxu0 %v1047
          %v1117 = vpop.f32.mrf.mxu0
          %v1118 = vadd.f32 0.0, %v1117
          %v1119 = vpop.f32.mrf.mxu0
          %1120 = vdwg.mxu0
          %p1121 = scmp.gt.s32.totalorder %s1030, %s38
          %s1122 = scalar_select %p1121, 1, 0
          %v1123 = vstv %s1122
          %vm1124 = vcmp.eq.s32.totalorder %v1123, 1
          %vm1125 = vmor %vm1124, %vm816
          %v1126 = vsel %vm1125, %v1118, -inf
          %s1127 = scalar_lea.vmem [#allocation4], %s1037
          %1128 = vst.msk [vmem:[%s1127] sm:$0xff] %vm1046, %v1126
          %v1129 = vsel %vm1046, %v1126, -inf
          %v1130 = vrot.slane %v1129, 4
          %v1131 = vmax.f32 %v1129, %v1130
          %v1132 = vrot.slane %v1131, 2
          %v1133 = vmax.f32 %v1131, %v1132
          %v1134 = vrot.slane %v1133, 1
          %v1135 = vmax.f32 %v1133, %v1134
          %v1136 = vmax.f32 %v1035, %v1135
          %v1137 = vsub.f32 %v1035, %v1136
          %v1138 = vmul.f32 %v1137, 1.442695
          %v1139 = vpow.pop %v1138
          %v1140 = vmul.f32 %v1036, %v1139
          %v1141 = vsub.f32 %v1126, %v1136
          %v1142 = vmul.f32 %v1141, 1.442695
          %v1143 = vpow.pop %v1142
          %v1144 = vsel %vm1046, %v1143, 0.0
          %v1145 = vrot.slane %v1144, 4
          %v1146 = vadd.f32 %v1144, %v1145
          %v1147 = vrot.slane %v1146, 2
          %v1148 = vadd.f32 %v1146, %v1147
          %v1149 = vrot.slane %v1148, 1
          %v1150 = vadd.f32 %v1148, %v1149
          %v1151 = vadd.f32 %v1140, %v1150
        $region115: #{tpu_custom_call.1} parent=63 // loop_footer
          %s1032 = sadd.s32 %s1030, 1
        $region116: #{tpu_custom_call.1} parent=63 // loop_footer_branch
          %1029 = sbr.rel target = $region112
        $region117: #{tpu_custom_call.1} parent=63 // loop_exit
          _
        %v1152 = vlog2.pop %v1036
        %v1153 = vmul.f32 %v1152, 0.6931472
        %v1154 = vadd.f32 %v1035, %v1153
        // While loop
        $region118: #{tpu_custom_call.1} parent=63 // loop_pre_header
          _
        $region119: #{tpu_custom_call.1} parent=63 // loop_header
          %s1156 = sphi %s38, %s1158
          %p1157 = scmp.ge.s32.totalorder %s1156, 1
        $region120: #{tpu_custom_call.1} parent=63 // loop_header_branch
          %1160 = sbr.rel (%p1157) target = $region124
        $region121: #{tpu_custom_call.1} parent=63 // loop_body
          %s1161 = smul.u32 %s1156, 8
          %s1162 = scalar_lea.vmem [#allocation4], %s1161
          %v1163 = vld [vmem:[%s1162] sm:$0xff]
          %v1164 = vsub.f32 %v1163, %v1154
          %v1165 = vmul.f32 %v1164, 1.442695
          %v1166 = vpow.pop %v1165
          %1168 = vrot.lane.b32.xlu0 %v809, 120
          %v1169 = vpop.permute.xlu0 %1168
          %vm1171 = vcmask 64512
          %v1173 = vsel %vm1171, %v1166, 0
          %1175 = vmatprep.subr.mxu0 0.0
          %1176 = vmatpush1.msra.mxu0 0.0
          %1177 = vmatprep.subr.mxu0 0.0
          %1178 = vmatpush1.msra.mxu0 0.0
          %1179 = vmatprep.subr.mxu0 0.0
          %1180 = vmatpush1.msra.mxu0 0.0
          %1181 = vmatprep.subr.mxu0 0.0
          %1182 = vmatpush1.msra.mxu0 0.0
          %1183 = vmatprep.subr.mxu0 0.0
          %1184 = vmatpush1.msra.mxu0 0.0
          %1185 = vmatprep.subr.mxu0 0.0
          %1186 = vmatpush1.msra.mxu0 0.0
          %1187 = vmatprep.subr.mxu0 0.0
          %1188 = vmatpush1.msra.mxu0 0.0
          %1189 = vmatprep.subr.mxu0 0.0
          %1190 = vmatpush1.msra.mxu0 0.0
          %1191 = vmatprep.subr.mxu0 0.0
          %1192 = vmatpush1.msra.mxu0 0.0
          %1193 = vmatprep.subr.mxu0 0.0
          %1194 = vmatpush1.msra.mxu0 0.0
          %1195 = vmatprep.subr.mxu0 0.0
          %1196 = vmatpush1.msra.mxu0 0.0
          %1197 = vmatprep.subr.mxu0 0.0
          %1198 = vmatpush1.msra.mxu0 0.0
          %1199 = vmatprep.subr.mxu0 0.0
          %1200 = vmatpush1.msra.mxu0 0.0
          %1201 = vmatprep.subr.mxu0 0.0
          %1202 = vmatpush1.msra.mxu0 0.0
          %1203 = vmatprep.subr.mxu0 0.0
          %1204 = vmatpush1.msra.mxu0 0.0
          %1205 = vmatprep.subr.mxu0 0.0
          %1206 = vmatpush1.msra.mxu0 %v1169
          %1207 = vmatprep.subr.mxu0 0.0
          %1208 = vmatpush2.msra.mxu0 0.0
          %1209 = vmatprep.subr.mxu0 0.0
          %1210 = vmatpush2.msra.mxu0 0.0
          %1211 = vmatprep.subr.mxu0 0.0
          %1212 = vmatpush2.msra.mxu0 0.0
          %1213 = vmatprep.subr.mxu0 0.0
          %1214 = vmatpush2.msra.mxu0 0.0
          %1215 = vmatprep.subr.mxu0 0.0
          %1216 = vmatpush2.msra.mxu0 0.0
          %1217 = vmatprep.subr.mxu0 0.0
          %1218 = vmatpush2.msra.mxu0 0.0
          %1219 = vmatprep.subr.mxu0 0.0
          %1220 = vmatpush2.msra.mxu0 0.0
          %1221 = vmatprep.subr.mxu0 0.0
          %1222 = vmatpush2.msra.mxu0 0.0
          %1223 = vmatprep.subr.mxu0 0.0
          %1224 = vmatpush2.msra.mxu0 0.0
          %1225 = vmatprep.subr.mxu0 0.0
          %1226 = vmatpush2.msra.mxu0 0.0
          %1227 = vmatprep.subr.mxu0 0.0
          %1228 = vmatpush2.msra.mxu0 0.0
          %1229 = vmatprep.subr.mxu0 0.0
          %1230 = vmatpush2.msra.mxu0 0.0
          %1231 = vmatprep.subr.mxu0 0.0
          %1232 = vmatpush2.msra.mxu0 0.0
          %1233 = vmatprep.subr.mxu0 0.0
          %1234 = vmatpush2.msra.mxu0 0.0
          %1235 = vmatprep.subr.mxu0 0.0
          %1236 = vmatpush2.msra.mxu0 0.0
          %1237 = vmatprep.subr.mxu0 0.0
          %1238 = vmatpush2.msra.mxu0 0.0
          %1239 = vmatprep.mubr.f32.mxu0 0.0
          %1240 = vmatmul.mubr.f32.gmra.mxu0 %v1173
          %v1241 = vpop.f32.mrf.mxu0
          %v1242 = vadd.f32 0.0, %v1241
          %v1243 = vpop.f32.mrf.mxu0
          %1244 = vdwg.mxu0
          %s1245 = scalar_lea.vmem [#allocation3], %s1161
          %v1246 = vld [vmem:[%s1245] sm:$0xff]
          %1248 = vrot.lane.b32.xlu0 %v1242, 8
          %v1249 = vpop.permute.xlu0 %1248
          %v1251 = vadd.f32 %v1246, %v1249
          %vm1252 = vcmask 130112
          %1253 = vst.msk [vmem:[%s1245] sm:$0xff] %vm1252, %v1251
        $region122: #{tpu_custom_call.1} parent=63 // loop_footer
          %s1158 = sadd.s32 %s1156, 1
        $region123: #{tpu_custom_call.1} parent=63 // loop_footer_branch
          %1155 = sbr.rel target = $region119
        $region124: #{tpu_custom_call.1} parent=63 // loop_exit
          _
        // While loop
        $region125: #{tpu_custom_call.1} parent=63 // loop_pre_header
          _
        $region126: #{tpu_custom_call.1} parent=63 // loop_header
          %s1255 = sphi %s38, %s1257
          %p1256 = scmp.ge.s32.totalorder %s1255, 1
          %v1260 = vphi -inf, %v1361
          %v1261 = vphi 0.0, %v1376
        $region127: #{tpu_custom_call.1} parent=63 // loop_header_branch
          %1259 = sbr.rel (%p1256) target = $region131
        $region128: #{tpu_custom_call.1} parent=63 // loop_body
          %s1262 = smul.u32 %s1255, 8
          %s1263 = scalar_lea.vmem [#allocation2], %s1262
          %v1264 = vld [vmem:[%s1263] sm:$0xff]
          %1266 = vrot.lane.b32.xlu0 %v1264, 112
          %v1267 = vpop.permute.xlu0 %1266
          %1269 = vrot.lane.b32.xlu0 %v724, 112
          %v1270 = vpop.permute.xlu0 %1269
          %vm1271 = vcmask 64512
          %v1272 = vsel %vm1271, %v1267, 0
          %v1274 = vsel %vm1271, %v1270, 0
          %1276 = vmatprep.subr.mxu0 0.0
          %1277 = vmatpush1.xpose.msra.mxu0 0.0
          %1278 = vmatprep.subr.mxu0 0.0
          %1279 = vmatpush1.xpose.msra.mxu0 0.0
          %1280 = vmatprep.subr.mxu0 0.0
          %1281 = vmatpush1.xpose.msra.mxu0 0.0
          %1282 = vmatprep.subr.mxu0 0.0
          %1283 = vmatpush1.xpose.msra.mxu0 0.0
          %1284 = vmatprep.subr.mxu0 0.0
          %1285 = vmatpush1.xpose.msra.mxu0 0.0
          %1286 = vmatprep.subr.mxu0 0.0
          %1287 = vmatpush1.xpose.msra.mxu0 0.0
          %1288 = vmatprep.subr.mxu0 0.0
          %1289 = vmatpush1.xpose.msra.mxu0 0.0
          %1290 = vmatprep.subr.mxu0 0.0
          %1291 = vmatpush1.xpose.msra.mxu0 0.0
          %1292 = vmatprep.subr.mxu0 0.0
          %1293 = vmatpush1.xpose.msra.mxu0 0.0
          %1294 = vmatprep.subr.mxu0 0.0
          %1295 = vmatpush1.xpose.msra.mxu0 0.0
          %1296 = vmatprep.subr.mxu0 0.0
          %1297 = vmatpush1.xpose.msra.mxu0 0.0
          %1298 = vmatprep.subr.mxu0 0.0
          %1299 = vmatpush1.xpose.msra.mxu0 0.0
          %1300 = vmatprep.subr.mxu0 0.0
          %1301 = vmatpush1.xpose.msra.mxu0 0.0
          %1302 = vmatprep.subr.mxu0 0.0
          %1303 = vmatpush1.xpose.msra.mxu0 0.0
          %1304 = vmatprep.subr.mxu0 0.0
          %1305 = vmatpush1.xpose.msra.mxu0 0.0
          %1306 = vmatprep.subr.mxu0 0.0
          %1307 = vmatpush1.xpose.msra.mxu0 %v1274
          %1308 = vmatprep.subr.mxu0 0.0
          %1309 = vmatpush2.xpose.msra.mxu0 0.0
          %1310 = vmatprep.subr.mxu0 0.0
          %1311 = vmatpush2.xpose.msra.mxu0 0.0
          %1312 = vmatprep.subr.mxu0 0.0
          %1313 = vmatpush2.xpose.msra.mxu0 0.0
          %1314 = vmatprep.subr.mxu0 0.0
          %1315 = vmatpush2.xpose.msra.mxu0 0.0
          %1316 = vmatprep.subr.mxu0 0.0
          %1317 = vmatpush2.xpose.msra.mxu0 0.0
          %1318 = vmatprep.subr.mxu0 0.0
          %1319 = vmatpush2.xpose.msra.mxu0 0.0
          %1320 = vmatprep.subr.mxu0 0.0
          %1321 = vmatpush2.xpose.msra.mxu0 0.0
          %1322 = vmatprep.subr.mxu0 0.0
          %1323 = vmatpush2.xpose.msra.mxu0 0.0
          %1324 = vmatprep.subr.mxu0 0.0
          %1325 = vmatpush2.xpose.msra.mxu0 0.0
          %1326 = vmatprep.subr.mxu0 0.0
          %1327 = vmatpush2.xpose.msra.mxu0 0.0
          %1328 = vmatprep.subr.mxu0 0.0
          %1329 = vmatpush2.xpose.msra.mxu0 0.0
          %1330 = vmatprep.subr.mxu0 0.0
          %1331 = vmatpush2.xpose.msra.mxu0 0.0
          %1332 = vmatprep.subr.mxu0 0.0
          %1333 = vmatpush2.xpose.msra.mxu0 0.0
          %1334 = vmatprep.subr.mxu0 0.0
          %1335 = vmatpush2.xpose.msra.mxu0 0.0
          %1336 = vmatprep.subr.mxu0 0.0
          %1337 = vmatpush2.xpose.msra.mxu0 0.0
          %1338 = vmatprep.subr.mxu0 0.0
          %1339 = vmatpush2.xpose.msra.mxu0 0.0
          %1340 = vmatprep.mubr.f32.mxu0 0.0
          %1341 = vmatmul.mubr.f32.gmra.mxu0 %v1272
          %v1342 = vpop.f32.mrf.mxu0
          %v1343 = vadd.f32 0.0, %v1342
          %v1344 = vpop.f32.mrf.mxu0
          %1345 = vdwg.mxu0
          %p1346 = scmp.gt.s32.totalorder %s1255, %s38
          %s1347 = scalar_select %p1346, 1, 0
          %v1348 = vstv %s1347
          %vm1349 = vcmp.eq.s32.totalorder %v1348, 1
          %vm1350 = vmor %vm1349, %vm816
          %v1351 = vsel %vm1350, %v1343, -inf
          %s1352 = scalar_lea.vmem [#allocation4], %s1262
          %1353 = vst.msk [vmem:[%s1352] sm:$0xff] %vm1271, %v1351
          %v1354 = vsel %vm1271, %v1351, -inf
          %v1355 = vrot.slane %v1354, 4
          %v1356 = vmax.f32 %v1354, %v1355
          %v1357 = vrot.slane %v1356, 2
          %v1358 = vmax.f32 %v1356, %v1357
          %v1359 = vrot.slane %v1358, 1
          %v1360 = vmax.f32 %v1358, %v1359
          %v1361 = vmax.f32 %v1260, %v1360
          %v1362 = vsub.f32 %v1260, %v1361
          %v1363 = vmul.f32 %v1362, 1.442695
          %v1364 = vpow.pop %v1363
          %v1365 = vmul.f32 %v1261, %v1364
          %v1366 = vsub.f32 %v1351, %v1361
          %v1367 = vmul.f32 %v1366, 1.442695
          %v1368 = vpow.pop %v1367
          %v1369 = vsel %vm1271, %v1368, 0.0
          %v1370 = vrot.slane %v1369, 4
          %v1371 = vadd.f32 %v1369, %v1370
          %v1372 = vrot.slane %v1371, 2
          %v1373 = vadd.f32 %v1371, %v1372
          %v1374 = vrot.slane %v1373, 1
          %v1375 = vadd.f32 %v1373, %v1374
          %v1376 = vadd.f32 %v1365, %v1375
        $region129: #{tpu_custom_call.1} parent=63 // loop_footer
          %s1257 = sadd.s32 %s1255, 1
        $region130: #{tpu_custom_call.1} parent=63 // loop_footer_branch
          %1254 = sbr.rel target = $region126
        $region131: #{tpu_custom_call.1} parent=63 // loop_exit
          _
        %v1377 = vlog2.pop %v1261
        %v1378 = vmul.f32 %v1377, 0.6931472
        %v1379 = vadd.f32 %v1260, %v1378
        // While loop
        $region132: #{tpu_custom_call.1} parent=63 // loop_pre_header
          _
        $region133: #{tpu_custom_call.1} parent=63 // loop_header
          %s1381 = sphi %s38, %s1383
          %p1382 = scmp.ge.s32.totalorder %s1381, 1
        $region134: #{tpu_custom_call.1} parent=63 // loop_header_branch
          %1385 = sbr.rel (%p1382) target = $region138
        $region135: #{tpu_custom_call.1} parent=63 // loop_body
          %s1386 = smul.u32 %s1381, 8
          %s1387 = scalar_lea.vmem [#allocation4], %s1386
          %v1388 = vld [vmem:[%s1387] sm:$0xff]
          %v1389 = vsub.f32 %v1388, %v1379
          %v1390 = vmul.f32 %v1389, 1.442695
          %v1391 = vpow.pop %v1390
          %1393 = vrot.lane.b32.xlu0 %v809, 112
          %v1394 = vpop.permute.xlu0 %1393
          %vm1396 = vcmask 64512
          %v1398 = vsel %vm1396, %v1391, 0
          %1400 = vmatprep.subr.mxu0 0.0
          %1401 = vmatpush1.msra.mxu0 0.0
          %1402 = vmatprep.subr.mxu0 0.0
          %1403 = vmatpush1.msra.mxu0 0.0
          %1404 = vmatprep.subr.mxu0 0.0
          %1405 = vmatpush1.msra.mxu0 0.0
          %1406 = vmatprep.subr.mxu0 0.0
          %1407 = vmatpush1.msra.mxu0 0.0
          %1408 = vmatprep.subr.mxu0 0.0
          %1409 = vmatpush1.msra.mxu0 0.0
          %1410 = vmatprep.subr.mxu0 0.0
          %1411 = vmatpush1.msra.mxu0 0.0
          %1412 = vmatprep.subr.mxu0 0.0
          %1413 = vmatpush1.msra.mxu0 0.0
          %1414 = vmatprep.subr.mxu0 0.0
          %1415 = vmatpush1.msra.mxu0 0.0
          %1416 = vmatprep.subr.mxu0 0.0
          %1417 = vmatpush1.msra.mxu0 0.0
          %1418 = vmatprep.subr.mxu0 0.0
          %1419 = vmatpush1.msra.mxu0 0.0
          %1420 = vmatprep.subr.mxu0 0.0
          %1421 = vmatpush1.msra.mxu0 0.0
          %1422 = vmatprep.subr.mxu0 0.0
          %1423 = vmatpush1.msra.mxu0 0.0
          %1424 = vmatprep.subr.mxu0 0.0
          %1425 = vmatpush1.msra.mxu0 0.0
          %1426 = vmatprep.subr.mxu0 0.0
          %1427 = vmatpush1.msra.mxu0 0.0
          %1428 = vmatprep.subr.mxu0 0.0
          %1429 = vmatpush1.msra.mxu0 0.0
          %1430 = vmatprep.subr.mxu0 0.0
          %1431 = vmatpush1.msra.mxu0 %v1394
          %1432 = vmatprep.subr.mxu0 0.0
          %1433 = vmatpush2.msra.mxu0 0.0
          %1434 = vmatprep.subr.mxu0 0.0
          %1435 = vmatpush2.msra.mxu0 0.0
          %1436 = vmatprep.subr.mxu0 0.0
          %1437 = vmatpush2.msra.mxu0 0.0
          %1438 = vmatprep.subr.mxu0 0.0
          %1439 = vmatpush2.msra.mxu0 0.0
          %1440 = vmatprep.subr.mxu0 0.0
          %1441 = vmatpush2.msra.mxu0 0.0
          %1442 = vmatprep.subr.mxu0 0.0
          %1443 = vmatpush2.msra.mxu0 0.0
          %1444 = vmatprep.subr.mxu0 0.0
          %1445 = vmatpush2.msra.mxu0 0.0
          %1446 = vmatprep.subr.mxu0 0.0
          %1447 = vmatpush2.msra.mxu0 0.0
          %1448 = vmatprep.subr.mxu0 0.0
          %1449 = vmatpush2.msra.mxu0 0.0
          %1450 = vmatprep.subr.mxu0 0.0
          %1451 = vmatpush2.msra.mxu0 0.0
          %1452 = vmatprep.subr.mxu0 0.0
          %1453 = vmatpush2.msra.mxu0 0.0
          %1454 = vmatprep.subr.mxu0 0.0
          %1455 = vmatpush2.msra.mxu0 0.0
          %1456 = vmatprep.subr.mxu0 0.0
          %1457 = vmatpush2.msra.mxu0 0.0
          %1458 = vmatprep.subr.mxu0 0.0
          %1459 = vmatpush2.msra.mxu0 0.0
          %1460 = vmatprep.subr.mxu0 0.0
          %1461 = vmatpush2.msra.mxu0 0.0
          %1462 = vmatprep.subr.mxu0 0.0
          %1463 = vmatpush2.msra.mxu0 0.0
          %1464 = vmatprep.mubr.f32.mxu0 0.0
          %1465 = vmatmul.mubr.f32.gmra.mxu0 %v1398
          %v1466 = vpop.f32.mrf.mxu0
          %v1467 = vadd.f32 0.0, %v1466
          %v1468 = vpop.f32.mrf.mxu0
          %1469 = vdwg.mxu0
          %s1470 = scalar_lea.vmem [#allocation3], %s1386
          %v1471 = vld [vmem:[%s1470] sm:$0xff]
          %1473 = vrot.lane.b32.xlu0 %v1467, 16
          %v1474 = vpop.permute.xlu0 %1473
          %v1476 = vadd.f32 %v1471, %v1474
          %vm1477 = vcmask 195712
          %1478 = vst.msk [vmem:[%s1470] sm:$0xff] %vm1477, %v1476
        $region136: #{tpu_custom_call.1} parent=63 // loop_footer
          %s1383 = sadd.s32 %s1381, 1
        $region137: #{tpu_custom_call.1} parent=63 // loop_footer_branch
          %1380 = sbr.rel target = $region133
        $region138: #{tpu_custom_call.1} parent=63 // loop_exit
          _
        // While loop
        $region139: #{tpu_custom_call.1} parent=63 // loop_pre_header
          _
        $region140: #{tpu_custom_call.1} parent=63 // loop_header
          %s1480 = sphi %s38, %s1482
          %p1481 = scmp.ge.s32.totalorder %s1480, 1
          %v1485 = vphi -inf, %v1586
          %v1486 = vphi 0.0, %v1601
        $region141: #{tpu_custom_call.1} parent=63 // loop_header_branch
          %1484 = sbr.rel (%p1481) target = $region145
        $region142: #{tpu_custom_call.1} parent=63 // loop_body
          %s1487 = smul.u32 %s1480, 8
          %s1488 = scalar_lea.vmem [#allocation2], %s1487
          %v1489 = vld [vmem:[%s1488] sm:$0xff]
          %1491 = vrot.lane.b32.xlu0 %v1489, 104
          %v1492 = vpop.permute.xlu0 %1491
          %1494 = vrot.lane.b32.xlu0 %v724, 104
          %v1495 = vpop.permute.xlu0 %1494
          %vm1496 = vcmask 64512
          %v1497 = vsel %vm1496, %v1492, 0
          %v1499 = vsel %vm1496, %v1495, 0
          %1501 = vmatprep.subr.mxu0 0.0
          %1502 = vmatpush1.xpose.msra.mxu0 0.0
          %1503 = vmatprep.subr.mxu0 0.0
          %1504 = vmatpush1.xpose.msra.mxu0 0.0
          %1505 = vmatprep.subr.mxu0 0.0
          %1506 = vmatpush1.xpose.msra.mxu0 0.0
          %1507 = vmatprep.subr.mxu0 0.0
          %1508 = vmatpush1.xpose.msra.mxu0 0.0
          %1509 = vmatprep.subr.mxu0 0.0
          %1510 = vmatpush1.xpose.msra.mxu0 0.0
          %1511 = vmatprep.subr.mxu0 0.0
          %1512 = vmatpush1.xpose.msra.mxu0 0.0
          %1513 = vmatprep.subr.mxu0 0.0
          %1514 = vmatpush1.xpose.msra.mxu0 0.0
          %1515 = vmatprep.subr.mxu0 0.0
          %1516 = vmatpush1.xpose.msra.mxu0 0.0
          %1517 = vmatprep.subr.mxu0 0.0
          %1518 = vmatpush1.xpose.msra.mxu0 0.0
          %1519 = vmatprep.subr.mxu0 0.0
          %1520 = vmatpush1.xpose.msra.mxu0 0.0
          %1521 = vmatprep.subr.mxu0 0.0
          %1522 = vmatpush1.xpose.msra.mxu0 0.0
          %1523 = vmatprep.subr.mxu0 0.0
          %1524 = vmatpush1.xpose.msra.mxu0 0.0
          %1525 = vmatprep.subr.mxu0 0.0
          %1526 = vmatpush1.xpose.msra.mxu0 0.0
          %1527 = vmatprep.subr.mxu0 0.0
          %1528 = vmatpush1.xpose.msra.mxu0 0.0
          %1529 = vmatprep.subr.mxu0 0.0
          %1530 = vmatpush1.xpose.msra.mxu0 0.0
          %1531 = vmatprep.subr.mxu0 0.0
          %1532 = vmatpush1.xpose.msra.mxu0 %v1499
          %1533 = vmatprep.subr.mxu0 0.0
          %1534 = vmatpush2.xpose.msra.mxu0 0.0
          %1535 = vmatprep.subr.mxu0 0.0
          %1536 = vmatpush2.xpose.msra.mxu0 0.0
          %1537 = vmatprep.subr.mxu0 0.0
          %1538 = vmatpush2.xpose.msra.mxu0 0.0
          %1539 = vmatprep.subr.mxu0 0.0
          %1540 = vmatpush2.xpose.msra.mxu0 0.0
          %1541 = vmatprep.subr.mxu0 0.0
          %1542 = vmatpush2.xpose.msra.mxu0 0.0
          %1543 = vmatprep.subr.mxu0 0.0
          %1544 = vmatpush2.xpose.msra.mxu0 0.0
          %1545 = vmatprep.subr.mxu0 0.0
          %1546 = vmatpush2.xpose.msra.mxu0 0.0
          %1547 = vmatprep.subr.mxu0 0.0
          %1548 = vmatpush2.xpose.msra.mxu0 0.0
          %1549 = vmatprep.subr.mxu0 0.0
          %1550 = vmatpush2.xpose.msra.mxu0 0.0
          %1551 = vmatprep.subr.mxu0 0.0
          %1552 = vmatpush2.xpose.msra.mxu0 0.0
          %1553 = vmatprep.subr.mxu0 0.0
          %1554 = vmatpush2.xpose.msra.mxu0 0.0
          %1555 = vmatprep.subr.mxu0 0.0
          %1556 = vmatpush2.xpose.msra.mxu0 0.0
          %1557 = vmatprep.subr.mxu0 0.0
          %1558 = vmatpush2.xpose.msra.mxu0 0.0
          %1559 = vmatprep.subr.mxu0 0.0
          %1560 = vmatpush2.xpose.msra.mxu0 0.0
          %1561 = vmatprep.subr.mxu0 0.0
          %1562 = vmatpush2.xpose.msra.mxu0 0.0
          %1563 = vmatprep.subr.mxu0 0.0
          %1564 = vmatpush2.xpose.msra.mxu0 0.0
          %1565 = vmatprep.mubr.f32.mxu0 0.0
          %1566 = vmatmul.mubr.f32.gmra.mxu0 %v1497
          %v1567 = vpop.f32.mrf.mxu0
          %v1568 = vadd.f32 0.0, %v1567
          %v1569 = vpop.f32.mrf.mxu0
          %1570 = vdwg.mxu0
          %p1571 = scmp.gt.s32.totalorder %s1480, %s38
          %s1572 = scalar_select %p1571, 1, 0
          %v1573 = vstv %s1572
          %vm1574 = vcmp.eq.s32.totalorder %v1573, 1
          %vm1575 = vmor %vm1574, %vm816
          %v1576 = vsel %vm1575, %v1568, -inf
          %s1577 = scalar_lea.vmem [#allocation4], %s1487
          %1578 = vst.msk [vmem:[%s1577] sm:$0xff] %vm1496, %v1576
          %v1579 = vsel %vm1496, %v1576, -inf
          %v1580 = vrot.slane %v1579, 4
          %v1581 = vmax.f32 %v1579, %v1580
          %v1582 = vrot.slane %v1581, 2
          %v1583 = vmax.f32 %v1581, %v1582
          %v1584 = vrot.slane %v1583, 1
          %v1585 = vmax.f32 %v1583, %v1584
          %v1586 = vmax.f32 %v1485, %v1585
          %v1587 = vsub.f32 %v1485, %v1586
          %v1588 = vmul.f32 %v1587, 1.442695
          %v1589 = vpow.pop %v1588
          %v1590 = vmul.f32 %v1486, %v1589
          %v1591 = vsub.f32 %v1576, %v1586
          %v1592 = vmul.f32 %v1591, 1.442695
          %v1593 = vpow.pop %v1592
          %v1594 = vsel %vm1496, %v1593, 0.0
          %v1595 = vrot.slane %v1594, 4
          %v1596 = vadd.f32 %v1594, %v1595
          %v1597 = vrot.slane %v1596, 2
          %v1598 = vadd.f32 %v1596, %v1597
          %v1599 = vrot.slane %v1598, 1
          %v1600 = vadd.f32 %v1598, %v1599
          %v1601 = vadd.f32 %v1590, %v1600
        $region143: #{tpu_custom_call.1} parent=63 // loop_footer
          %s1482 = sadd.s32 %s1480, 1
        $region144: #{tpu_custom_call.1} parent=63 // loop_footer_branch
          %1479 = sbr.rel target = $region140
        $region145: #{tpu_custom_call.1} parent=63 // loop_exit
          _
        %v1602 = vlog2.pop %v1486
        %v1603 = vmul.f32 %v1602, 0.6931472
        %v1604 = vadd.f32 %v1485, %v1603
        // While loop
        $region146: #{tpu_custom_call.1} parent=63 // loop_pre_header
          _
        $region147: #{tpu_custom_call.1} parent=63 // loop_header
          %s1606 = sphi %s38, %s1608
          %p1607 = scmp.ge.s32.totalorder %s1606, 1
        $region148: #{tpu_custom_call.1} parent=63 // loop_header_branch
          %1610 = sbr.rel (%p1607) target = $region152
        $region149: #{tpu_custom_call.1} parent=63 // loop_body
          %s1611 = smul.u32 %s1606, 8
          %s1612 = scalar_lea.vmem [#allocation4], %s1611
          %v1613 = vld [vmem:[%s1612] sm:$0xff]
          %v1614 = vsub.f32 %v1613, %v1604
          %v1615 = vmul.f32 %v1614, 1.442695
          %v1616 = vpow.pop %v1615
          %1618 = vrot.lane.b32.xlu0 %v809, 104
          %v1619 = vpop.permute.xlu0 %1618
          %vm1621 = vcmask 64512
          %v1623 = vsel %vm1621, %v1616, 0
          %1625 = vmatprep.subr.mxu0 0.0
          %1626 = vmatpush1.msra.mxu0 0.0
          %1627 = vmatprep.subr.mxu0 0.0
          %1628 = vmatpush1.msra.mxu0 0.0
          %1629 = vmatprep.subr.mxu0 0.0
          %1630 = vmatpush1.msra.mxu0 0.0
          %1631 = vmatprep.subr.mxu0 0.0
          %1632 = vmatpush1.msra.mxu0 0.0
          %1633 = vmatprep.subr.mxu0 0.0
          %1634 = vmatpush1.msra.mxu0 0.0
          %1635 = vmatprep.subr.mxu0 0.0
          %1636 = vmatpush1.msra.mxu0 0.0
          %1637 = vmatprep.subr.mxu0 0.0
          %1638 = vmatpush1.msra.mxu0 0.0
          %1639 = vmatprep.subr.mxu0 0.0
          %1640 = vmatpush1.msra.mxu0 0.0
          %1641 = vmatprep.subr.mxu0 0.0
          %1642 = vmatpush1.msra.mxu0 0.0
          %1643 = vmatprep.subr.mxu0 0.0
          %1644 = vmatpush1.msra.mxu0 0.0
          %1645 = vmatprep.subr.mxu0 0.0
          %1646 = vmatpush1.msra.mxu0 0.0
          %1647 = vmatprep.subr.mxu0 0.0
          %1648 = vmatpush1.msra.mxu0 0.0
          %1649 = vmatprep.subr.mxu0 0.0
          %1650 = vmatpush1.msra.mxu0 0.0
          %1651 = vmatprep.subr.mxu0 0.0
          %1652 = vmatpush1.msra.mxu0 0.0
          %1653 = vmatprep.subr.mxu0 0.0
          %1654 = vmatpush1.msra.mxu0 0.0
          %1655 = vmatprep.subr.mxu0 0.0
          %1656 = vmatpush1.msra.mxu0 %v1619
          %1657 = vmatprep.subr.mxu0 0.0
          %1658 = vmatpush2.msra.mxu0 0.0
          %1659 = vmatprep.subr.mxu0 0.0
          %1660 = vmatpush2.msra.mxu0 0.0
          %1661 = vmatprep.subr.mxu0 0.0
          %1662 = vmatpush2.msra.mxu0 0.0
          %1663 = vmatprep.subr.mxu0 0.0
          %1664 = vmatpush2.msra.mxu0 0.0
          %1665 = vmatprep.subr.mxu0 0.0
          %1666 = vmatpush2.msra.mxu0 0.0
          %1667 = vmatprep.subr.mxu0 0.0
          %1668 = vmatpush2.msra.mxu0 0.0
          %1669 = vmatprep.subr.mxu0 0.0
          %1670 = vmatpush2.msra.mxu0 0.0
          %1671 = vmatprep.subr.mxu0 0.0
          %1672 = vmatpush2.msra.mxu0 0.0
          %1673 = vmatprep.subr.mxu0 0.0
          %1674 = vmatpush2.msra.mxu0 0.0
          %1675 = vmatprep.subr.mxu0 0.0
          %1676 = vmatpush2.msra.mxu0 0.0
          %1677 = vmatprep.subr.mxu0 0.0
          %1678 = vmatpush2.msra.mxu0 0.0
          %1679 = vmatprep.subr.mxu0 0.0
          %1680 = vmatpush2.msra.mxu0 0.0
          %1681 = vmatprep.subr.mxu0 0.0
          %1682 = vmatpush2.msra.mxu0 0.0
          %1683 = vmatprep.subr.mxu0 0.0
          %1684 = vmatpush2.msra.mxu0 0.0
          %1685 = vmatprep.subr.mxu0 0.0
          %1686 = vmatpush2.msra.mxu0 0.0
          %1687 = vmatprep.subr.mxu0 0.0
          %1688 = vmatpush2.msra.mxu0 0.0
          %1689 = vmatprep.mubr.f32.mxu0 0.0
          %1690 = vmatmul.mubr.f32.gmra.mxu0 %v1623
          %v1691 = vpop.f32.mrf.mxu0
          %v1692 = vadd.f32 0.0, %v1691
          %v1693 = vpop.f32.mrf.mxu0
          %1694 = vdwg.mxu0
          %s1695 = scalar_lea.vmem [#allocation3], %s1611
          %v1696 = vld [vmem:[%s1695] sm:$0xff]
          %1698 = vrot.lane.b32.xlu0 %v1692, 24
          %v1699 = vpop.permute.xlu0 %1698
          %v1701 = vadd.f32 %v1696, %v1699
          %vm1702 = vcmask 261312
          %1703 = vst.msk [vmem:[%s1695] sm:$0xff] %vm1702, %v1701
        $region150: #{tpu_custom_call.1} parent=63 // loop_footer
          %s1608 = sadd.s32 %s1606, 1
        $region151: #{tpu_custom_call.1} parent=63 // loop_footer_branch
          %1605 = sbr.rel target = $region147
        $region152: #{tpu_custom_call.1} parent=63 // loop_exit
          _
        // Predicated region
        $region153: #{tpu_custom_call.1} parent=63 // pred_check
          %p1704 = pneg %p549
        $region154: #{tpu_custom_call.1} parent=63 // pred_check_branch
          %1706 = sbr.rel (%p1704) target = $region156
        $region155: #{tpu_custom_call.1} parent=63 // pred_region
          %v1707 = vld [vmem:[#allocation3] sm:$0xff]
          %v1708 = vld [vmem:[#allocation16] sm:$0xff]
          %v1709 = vld [vmem:[#allocation16 + $0x8] sm:$0xff]
          %v1710 = vld [vmem:[#allocation16 + $0x10] sm:$0xff]
          %v1711 = vld [vmem:[#allocation16 + $0x18] sm:$0xff]
          %v1712 = vld [vmem:[%s10] sm:$0x1]
          %v1714 = vlaneseq
          %v1715 = vshrl.u32 %v1714, 7
          %v1716 = vsub.s32 0, %v1715
          %v1717 = vrot.slane %v1712, %v1716
          %v1720 = vsel %vm653, %v1707, 0
          %1722 = vmatprep.subr.mxu0 0.0
          %1723 = vmatpush1.msra.mxu0 0.0
          %1724 = vmatprep.subr.mxu0 0.0
          %1725 = vmatpush1.msra.mxu0 0.0
          %1726 = vmatprep.subr.mxu0 0.0
          %1727 = vmatpush1.msra.mxu0 0.0
          %1728 = vmatprep.subr.mxu0 0.0
          %1729 = vmatpush1.msra.mxu0 0.0
          %1730 = vmatprep.subr.mxu0 0.0
          %1731 = vmatpush1.msra.mxu0 0.0
          %1732 = vmatprep.subr.mxu0 0.0
          %1733 = vmatpush1.msra.mxu0 0.0
          %1734 = vmatprep.subr.mxu0 0.0
          %1735 = vmatpush1.msra.mxu0 0.0
          %1736 = vmatprep.subr.mxu0 0.0
          %1737 = vmatpush1.msra.mxu0 0.0
          %1738 = vmatprep.subr.mxu0 0.0
          %1739 = vmatpush1.msra.mxu0 0.0
          %1740 = vmatprep.subr.mxu0 0.0
          %1741 = vmatpush1.msra.mxu0 0.0
          %1742 = vmatprep.subr.mxu0 0.0
          %1743 = vmatpush1.msra.mxu0 0.0
          %1744 = vmatprep.subr.mxu0 0.0
          %1745 = vmatpush1.msra.mxu0 0.0
          %1746 = vmatprep.subr.mxu0 0.0
          %1747 = vmatpush1.msra.mxu0 %v1711
          %1748 = vmatprep.subr.mxu0 0.0
          %1749 = vmatpush1.msra.mxu0 %v1710
          %1750 = vmatprep.subr.mxu0 0.0
          %1751 = vmatpush1.msra.mxu0 %v1709
          %1752 = vmatprep.subr.mxu0 0.0
          %1753 = vmatpush1.msra.mxu0 %v1708
          %1754 = vmatprep.subr.mxu0 0.0
          %1755 = vmatpush2.msra.mxu0 0.0
          %1756 = vmatprep.subr.mxu0 0.0
          %1757 = vmatpush2.msra.mxu0 0.0
          %1758 = vmatprep.subr.mxu0 0.0
          %1759 = vmatpush2.msra.mxu0 0.0
          %1760 = vmatprep.subr.mxu0 0.0
          %1761 = vmatpush2.msra.mxu0 0.0
          %1762 = vmatprep.subr.mxu0 0.0
          %1763 = vmatpush2.msra.mxu0 0.0
          %1764 = vmatprep.subr.mxu0 0.0
          %1765 = vmatpush2.msra.mxu0 0.0
          %1766 = vmatprep.subr.mxu0 0.0
          %1767 = vmatpush2.msra.mxu0 0.0
          %1768 = vmatprep.subr.mxu0 0.0
          %1769 = vmatpush2.msra.mxu0 0.0
          %1770 = vmatprep.subr.mxu0 0.0
          %1771 = vmatpush2.msra.mxu0 0.0
          %1772 = vmatprep.subr.mxu0 0.0
          %1773 = vmatpush2.msra.mxu0 0.0
          %1774 = vmatprep.subr.mxu0 0.0
          %1775 = vmatpush2.msra.mxu0 0.0
          %1776 = vmatprep.subr.mxu0 0.0
          %1777 = vmatpush2.msra.mxu0 0.0
          %1778 = vmatprep.subr.mxu0 0.0
          %1779 = vmatpush2.msra.mxu0 0.0
          %1780 = vmatprep.subr.mxu0 0.0
          %1781 = vmatpush2.msra.mxu0 0.0
          %1782 = vmatprep.subr.mxu0 0.0
          %1783 = vmatpush2.msra.mxu0 0.0
          %1784 = vmatprep.subr.mxu0 0.0
          %1785 = vmatpush2.msra.mxu0 0.0
          %1786 = vmatprep.mubr.f32.mxu0 0.0
          %1787 = vmatmul.mubr.f32.gmra.mxu0 %v1720
          %v1788 = vpop.f32.mrf.mxu0
          %v1789 = vadd.f32 %v1717, %v1788
          %v1790 = vpop.f32.mrf.mxu0
          %1791 = vdwg.mxu0
          %1792 = vst.msk [vmem:[%s548] sm:$0xff] %vm653, %v1789
        $region156: #{tpu_custom_call.1} parent=63 // pred_fallthru
          _
        %s1793 = sand.u32 %s303, 1
        %s1794 = scalar_lea.sflag [#allocation7], %s1793
        %s1795 = sand.u32 %s303, 1
        %s1796 = smul.addr %s1795, 8
        %s1797 = scalar_lea.vmem [#allocation17], %s1796
        // Predicated region
        $region157: #{tpu_custom_call.1} parent=63 // pred_check
          %p1798 = pneg %p313
        $region158: #{tpu_custom_call.1} parent=63 // pred_check_branch
          %1800 = sbr.rel (%p1798) target = $region160
        $region159: #{tpu_custom_call.1} parent=63 // pred_region
          %s1802 = ssub.s32 128, 128
          %1803 = vsyncadd %s1794, %s1802
          %s1804 = smul.addr %s37, 128
          %s1805 = scalar_lea.hbm %s11, %s1804
          %s1807 = sshll.u32 %s1797, 4
          %s1808 = int_to_ptr.vmem [resolvable:$true] %s1807
          %1810 = dma.vmem_to_hbm [thread:$0]  %s1808, 128, %s1805, %s1794
        $region160: #{tpu_custom_call.1} parent=63 // pred_fallthru
          _
      $region64: #{tpu_custom_call.1} parent=5 // pred_fallthru
        _
      %p1811 = scmp.le.s32.totalorder 2, %s28
      // Predicated region
      $region161: #{tpu_custom_call.1} parent=5 // pred_check
        %p1812 = pneg %p1811
      $region162: #{tpu_custom_call.1} parent=5 // pred_check_branch
        %1814 = sbr.rel (%p1812) target = $region164
      $region163: #{tpu_custom_call.1} parent=5 // pred_region
        %s1815 = ssub.s32 %s28, 2
        // Predicated region
        $region165: #{tpu_custom_call.1} parent=163 // pred_check
          %p1816 = pneg %p319
        $region166: #{tpu_custom_call.1} parent=163 // pred_check_branch
          %1818 = sbr.rel (%p1816) target = $region168
        $region167: #{tpu_custom_call.1} parent=163 // pred_region
          %s1819 = sand.u32 %s304, 1
          %s1820 = scalar_lea.sflag [#allocation7], %s1819
          %s1821 = sand.u32 %s304, 1
          %s1822 = smul.addr %s1821, 8
          %s1823 = scalar_lea.vmem [#allocation17], %s1822
          %1824 = dma.done %s1820, 128
        $region168: #{tpu_custom_call.1} parent=163 // pred_fallthru
          _
      $region164: #{tpu_custom_call.1} parent=5 // pred_fallthru
        _
    $region6: #{tpu_custom_call.1} parent=1 // loop_footer
      %s32 = sadd.s32 1, %s28
    $region7: #{tpu_custom_call.1} parent=1 // loop_footer_branch
      %27 = sbr.rel target = $region3
    $region8: #{tpu_custom_call.1} parent=1 // loop_exit
      _
    %1825 = vsyncpa [#allocation6], 1
    %s1826 = scalar_lea.sflag [#allocation6], 1
    %1827 = vsyncpa %s1826, 1
    %1828 = vsyncpa [#allocation9], 1
    %s1829 = scalar_lea.sflag [#allocation9], 1
    %1830 = vsyncpa %s1829, 1
    %1831 = vsyncpa [#allocation12], 1
    %1832 = vsyncpa [#allocation15], 1
    %1833 = vsyncpa [#allocation7], 1
    %s1834 = scalar_lea.sflag [#allocation7], 1
    %1835 = vsyncpa %s1834, 1

</llo_original>
